<compile_context>
chip_gen: v6e
topology: v6e:2x2x1
jax: 0.10.0
libtpu: 0.0.40
codegen_flags: <defaults>
</compile_context>

<pallas_src>
import jax
import jax.numpy as jnp
from jax.experimental import pallas as pl
from jax.experimental.pallas import tpu as pltpu


# Above every default scoped limit (v5e 16 MiB, v6e/v7x 32 MiB), safely below the
# smallest physical VMEM (v7x: 64 MiB).
_VMEM_LIMIT_BYTES = 48 * 1024 * 1024


# ---------------------------------------------------------------------------
# Pallas kernels
# ---------------------------------------------------------------------------

def _conv3x3_bn_relu_kernel(x_ref, w_ref, b_ref, o_ref):
    """3x3 conv (stride 1, pad 1) + folded-BN bias + ReLU for one (batch, row-tile).

    x_ref: (1, H+2, W, Kp) bf16   dx-packed, spatially padded image (per-batch resident)
    w_ref: (3, Kp, Cout)   bf16   dy-major folded weights, rows = dx*Cin + c
    b_ref: (1, Cout)       f32    folded BN bias
    o_ref: (1, TH*W, Cout)        output row-tile, spatially flattened
    """
    w_out = x_ref.shape[2]                    # W
    kp = x_ref.shape[3]
    th = o_ref.shape[1] // w_out
    cout = o_ref.shape[2]

    rt = pl.program_id(1)
    r0 = pl.multiple_of(rt * th, th)

    acc = jnp.zeros((th * w_out, cout), jnp.float32)
    for dy in range(3):                       # 3 matmuls; dy slices an outer dim only
        slab = x_ref[0, pl.ds(r0 + dy, th), :, :].reshape(th * w_out, kp)
        acc = acc + jnp.dot(slab, w_ref[dy], preferred_element_type=jnp.float32)
    o_ref[0] = jnp.maximum(acc + b_ref[...], 0.0).astype(o_ref.dtype)


def _qkv_proj_kernel(x_ref, w_ref, b_ref, o_ref):
    """Packed 1x1 q/k/v projection: one wide matmul per row-tile.

    x_ref: (TP, C_p)  bf16    w_ref: (C_p, D) bf16    b_ref: (1, D) f32
    o_ref: (TP, D)    bf16    with D = 2*Cq_p + C_p, columns = [q | k | v]
    """
    y = jnp.dot(x_ref[...], w_ref[...], preferred_element_type=jnp.float32) + b_ref[...]
    o_ref[...] = y.astype(o_ref.dtype)


def _attention_kernel(x_ref, qkv_ref, gamma_ref, feat_ref, attn_ref):
    """Row-tiled softmax attention + gamma residual (no scratch carry, fully parallel grid).

    x_ref:    (1, TQ, C_p) bf16   residual rows of this query tile
    qkv_ref:  (1, HW, D)   bf16   packed [q | k | v] for the whole batch slice (per-batch resident)
    gamma:    SMEM (1,) f32
    feat_ref: (1, TQ, C_p) bf16   gamma*out + x
    attn_ref: (1, TQ, HW)  bf16   softmax attention rows
    """
    tq = feat_ref.shape[1]
    c_p = feat_ref.shape[2]
    d = qkv_ref.shape[2]
    cq_p = (d - c_p) // 2

    qt = pl.program_id(1)
    r0 = pl.multiple_of(qt * tq, tq)

    q = qkv_ref[0, pl.ds(r0, tq), pl.ds(0, cq_p)]        # (TQ, Cq_p) bf16
    k = qkv_ref[0, :, pl.ds(cq_p, cq_p)]                 # (HW, Cq_p) bf16
    v = qkv_ref[0, :, pl.ds(2 * cq_p, c_p)]              # (HW, C_p)  bf16

    # energy[i, j] = <q_i, k_j>   (bf16 operands, f32 MXU accumulation)
    energy = jax.lax.dot_general(
        q, k, dimension_numbers=(((1,), (1,)), ((), ())),
        preferred_element_type=jnp.float32)              # (TQ, HW) f32

    # row-wise softmax kept in f32 (VPU/EUP); approx reciprocal uses the free EUP slot
    # TODO(synk): on v6e/v7x the single-EUP f32 exp may be the binding slot; if so
    # compute exp in bf16 (keep max/sum in f32).  v5e EUP has no bf16 — keep f32 there.
    m = jnp.max(energy, axis=-1, keepdims=True)
    e = jnp.exp(energy - m)
    denom = jnp.sum(e, axis=-1, keepdims=True)
    attn = e * pl.reciprocal(denom, approx=True)         # (TQ, HW) f32

    attn_b = attn.astype(jnp.bfloat16)
    attn_ref[0] = attn_b

    # out[i, c] = sum_j attn[i, j] * v[j, c]   (== V @ attn^T in NCHW-speak)
    out = jnp.dot(attn_b, v, preferred_element_type=jnp.float32)   # (TQ, C_p) f32

    feat_ref[0] = (gamma_ref[0] * out + x_ref[0].astype(jnp.float32)).astype(feat_ref.dtype)


# ---------------------------------------------------------------------------
# Wrappers (BN folding, dx packing, channel padding, pallas_call plumbing)
# ---------------------------------------------------------------------------

def _round_up(n, m):
    return ((n + m - 1) // m) * m


def _fold_bn_pack(w_hwio, g, b, m, v, kp, cout_p, eps=1e-5):
    """Fold inference BN into bias-free conv weights; pack dx taps into the contraction
    dim (row index = dx*Cin + c, dy-major blocks); zero-pad to (3, kp, cout_p); bf16."""
    s = g / jnp.sqrt(v + eps)
    w = (w_hwio * s[None, None, None, :]).astype(jnp.float32)     # (3, 3, Cin, Cout)
    bias = (b - m * s).astype(jnp.float32)
    kh, kw, cin, cout = w.shape
    w = w.reshape(kh, kw * cin, cout)                             # (3, 3*Cin, Cout)
    w = jnp.pad(w, ((0, 0), (0, kp - kw * cin), (0, cout_p - cout)))
    bias = jnp.pad(bias, (0, cout_p - cout)).reshape(1, cout_p)
    return w.astype(jnp.bfloat16), bias


def _pack_dx_shifts(x_nhwc, kp):
    """Spatially pad by 1 and concatenate the 3 dx-shifted slabs along the channel dim,
    zero-padded to kp lanes.  Returns (B, H+2, W, kp) bf16, channel index = dx*Cin + c."""
    B, H, W, cin = x_nhwc.shape
    xpad = jnp.pad(x_nhwc, ((0, 0), (1, 1), (1, 1), (0, 0)))
    xs = jnp.concatenate([xpad[:, :, dx:dx + W, :] for dx in range(3)], axis=-1)
    xs = jnp.pad(xs, ((0, 0), (0, 0), (0, 0), (0, kp - 3 * cin)))
    return xs.astype(jnp.bfloat16)


def _pack_qkv(wq, bq, wk, bk, wv, bv, c_p, cq_p):
    """Concatenate the 1x1 q/k/v conv weights into one lane-padded matmul (bf16 weights,
    f32 biases)."""
    def pw(w, rows, cols):
        return jnp.pad(w.astype(jnp.float32),
                       ((0, rows - w.shape[0]), (0, cols - w.shape[1])))

    def pb(x, n):
        return jnp.pad(x.astype(jnp.float32), (0, n - x.shape[0]))

    w = jnp.concatenate([pw(wq, c_p, cq_p), pw(wk, c_p, cq_p), pw(wv, c_p, c_p)],
                        axis=1)                                   # (C_p, 2*Cq_p + C_p)
    b = jnp.concatenate([pb(bq, cq_p), pb(bk, cq_p), pb(bv, c_p)]).reshape(1, -1)
    return w.astype(jnp.bfloat16), b


def conv3x3_bn_relu(x_pack, w3, b1, th, out_dtype):
    """x_pack: (B, H+2, W, Kp) bf16 dx-packed image.  Returns (B, H*W, Cout)."""
    B, Hp2, W, Kp = x_pack.shape
    H = Hp2 - 2
    Cout = w3.shape[-1]
    n_rt = H // th
    # TODO(synk): on v7x (64 MiB VMEM) consider pipeline_mode=pl.Buffered(1) for the
    # per-batch resident image block if VMEM gets tight at production H*W.
    return pl.pallas_call(
        _conv3x3_bn_relu_kernel,
        out_shape=jax.ShapeDtypeStruct((B, H * W, Cout), out_dtype),
        grid=(B, n_rt),
        in_specs=[
            pl.BlockSpec((1, Hp2, W, Kp), lambda b, rt: (b, 0, 0, 0)),  # resident per batch
            pl.BlockSpec((3, Kp, Cout), lambda b, rt: (0, 0, 0)),
            pl.BlockSpec((1, Cout), lambda b, rt: (0, 0)),
        ],
        out_specs=pl.BlockSpec((1, th * W, Cout), lambda b, rt: (b, rt, 0)),
        compiler_params=pltpu.CompilerParams(
            dimension_semantics=("parallel", "parallel"),
            vmem_limit_bytes=_VMEM_LIMIT_BYTES),
    )(x_pack, w3, b1)


def qkv_projection(x2d, w, b, tp):
    """x2d: (B*HW, C_p) bf16.  Returns packed (B*HW, D) bf16 with D = 2*Cq_p + C_p."""
    R, C_p = x2d.shape
    D = w.shape[1]
    return pl.pallas_call(
        _qkv_proj_kernel,
        out_shape=jax.ShapeDtypeStruct((R, D), jnp.bfloat16),
        grid=(R // tp,),
        in_specs=[pl.BlockSpec((tp, C_p), lambda r: (r, 0)),
                  pl.BlockSpec((C_p, D), lambda r: (0, 0)),
                  pl.BlockSpec((1, D), lambda r: (0, 0))],
        out_specs=pl.BlockSpec((tp, D), lambda r: (r, 0)),
        compiler_params=pltpu.CompilerParams(
            dimension_semantics=("parallel",),
            vmem_limit_bytes=_VMEM_LIMIT_BYTES),
    )(x2d, w, b)


def attention_core(xf, qkv, gamma, tq):
    """xf: (B, HW, C_p) bf16, qkv: (B, HW, D) bf16.
    Returns feat (B, HW, C_p) bf16 and attention (B, HW, HW) bf16."""
    B, HW, C_p = xf.shape
    D = qkv.shape[2]
    n_qt = HW // tq
    feat, attn = pl.pallas_call(
        _attention_kernel,
        out_shape=(jax.ShapeDtypeStruct((B, HW, C_p), jnp.bfloat16),
                   jax.ShapeDtypeStruct((B, HW, HW), jnp.bfloat16)),
        grid=(B, n_qt),
        in_specs=[
            pl.BlockSpec((1, tq, C_p), lambda b, qt: (b, qt, 0)),    # residual rows only
            pl.BlockSpec((1, HW, D), lambda b, qt: (b, 0, 0)),       # resident per batch
            pl.BlockSpec(memory_space=pltpu.MemorySpace.SMEM),       # gamma scalar
        ],
        out_specs=(pl.BlockSpec((1, tq, C_p), lambda b, qt: (b, qt, 0)),
                   pl.BlockSpec((1, tq, HW), lambda b, qt: (b, qt, 0))),
        compiler_params=pltpu.CompilerParams(
            dimension_semantics=("parallel", "parallel"),            # qt parallel: v7x 2-TC
            vmem_limit_bytes=_VMEM_LIMIT_BYTES),
    )(xf, qkv, gamma)
    return feat, attn


def attention_layer_forward(x_nchw, P, pos=None):
    """Full AttentionLayer.forward.
    Returns (out_feat NCHW f32, attention (B, HW, HW) bf16)."""
    f32 = jnp.float32
    x_nhwc = jnp.transpose(x_nchw, (0, 2, 3, 1)).astype(f32)
    B, H, W, Cin = x_nhwc.shape
    C = P["w_pre"].shape[-1]                   # out_dim
    HW = H * W
    C_p = _round_up(C, 128)
    Cq_p = _round_up(P["wq"].shape[-1], 128)

    TH = 16 if H % 16 == 0 else (8 if H % 8 == 0 else H)
    TQ = 256 if HW % 256 == 0 else (128 if HW % 128 == 0 else HW)
    rows = B * HW
    TP = 512 if rows % 512 == 0 else (256 if rows % 256 == 0 else
                                      (128 if rows % 128 == 0 else rows))
    # TODO(synk): derive TH/TQ and vmem_limit_bytes from pltpu.get_tpu_info() for large
    # production H*W on v7x (64 MiB VMEM).

    # pre_conv: Conv3x3(no bias) + BN + ReLU  (dx taps packed into the contraction dim)
    Kp_pre = _round_up(3 * Cin, 128)
    w_pre, b_pre = _fold_bn_pack(P["w_pre"], P["pre_bn_g"], P["pre_bn_b"],
                                 P["pre_bn_m"], P["pre_bn_v"], Kp_pre, C_p)
    xf = conv3x3_bn_relu(_pack_dx_shifts(x_nhwc, Kp_pre), w_pre, b_pre, TH,
                         out_dtype=jnp.bfloat16)                     # (B, HW, C_p) bf16

    if pos is not None:                                              # pos: (1, C, H, W)
        pos_f = jnp.transpose(pos, (0, 2, 3, 1)).reshape(1, HW, C).astype(f32)
        xf = (xf.astype(f32) + jnp.pad(pos_f, ((0, 0), (0, 0), (0, C_p - C)))
              ).astype(jnp.bfloat16)

    # packed 1x1 q/k/v projection (separate kernel -> attention grid is fully parallel)
    w_qkv, b_qkv = _pack_qkv(P["wq"], P["bq"], P["wk"], P["bk"],
                             P["wv"], P["bv"], C_p, Cq_p)
    qkv = qkv_projection(xf.reshape(rows, C_p), w_qkv, b_qkv, TP).reshape(B, HW, -1)

    # tiled softmax attention + gamma residual
    feat, attn = attention_core(xf, qkv, P["gamma"].astype(f32), TQ)

    # final_conv: Conv3x3(no bias) + BN + ReLU  (drop lane padding before repacking)
    Kp_fin = _round_up(3 * C, 128)
    w_fin, b_fin = _fold_bn_pack(P["w_fin"], P["fin_bn_g"], P["fin_bn_b"],
                                 P["fin_bn_m"], P["fin_bn_v"], Kp_fin, C_p)
    feat_nhwc = feat.reshape(B, H, W, C_p)[..., :C]
    outf = conv3x3_bn_relu(_pack_dx_shifts(feat_nhwc, Kp_fin), w_fin, b_fin, TH,
                           out_dtype=jnp.float32)                    # final output f32

    out_nchw = jnp.transpose(outf.reshape(B, H, W, C_p)[..., :C], (0, 3, 1, 2))
    return out_nchw, attn


# ---------------------------------------------------------------------------
# Pure-JAX reference (for correctness checking)
# ---------------------------------------------------------------------------

def reference(x_nchw, P, pos=None, eps=1e-5):
    hp = jax.lax.Precision.HIGHEST

    def convbnrelu(x, w_hwio, g, b, m, v):
        y = jax.lax.conv_general_dilated(
            x, w_hwio, window_strides=(1, 1), padding="SAME",
            dimension_numbers=("NCHW", "HWIO", "NCHW"), precision=hp)
        s = g / jnp.sqrt(v + eps)
        y = (y - m[None, :, None, None]) * s[None, :, None, None] + b[None, :, None, None]
        return jnp.maximum(y, 0.0)

    x = convbnrelu(x_nchw, P["w_pre"], P["pre_bn_g"], P["pre_bn_b"],
                   P["pre_bn_m"], P["pre_bn_v"])
    if pos is not None:
        x = x + pos
    B, C, H, W = x.shape

    def conv1x1(x, w, b):  # w: (Cin, Cout)
        return jnp.einsum("bchw,cd->bdhw", x, w, precision=hp) + b[None, :, None, None]

    q = conv1x1(x, P["wq"], P["bq"]).reshape(B, -1, H * W).transpose(0, 2, 1)
    k = conv1x1(x, P["wk"], P["bk"]).reshape(B, -1, H * W)
    v = conv1x1(x, P["wv"], P["bv"]).reshape(B, -1, H * W)
    energy = jnp.einsum("bic,bcj->bij", q, k, precision=hp)
    attn = jax.nn.softmax(energy, axis=-1)
    out = jnp.einsum("bcj,bij->bci", v, attn, precision=hp)          # V @ attn^T
    out = out.reshape(B, C, H, W)
    out_feat = P["gamma"][0] * out + x
    out_feat = convbnrelu(out_feat, P["w_fin"], P["fin_bn_g"], P["fin_bn_b"],
                          P["fin_bn_m"], P["fin_bn_v"])
    return out_feat, attn


# ---------------------------------------------------------------------------
# Deterministic parameter construction + run
# ---------------------------------------------------------------------------

def make_params(key, in_dim, out_dim, ratio):
    ks = jax.random.split(key, 12)
    cq = out_dim // ratio
    f32 = jnp.float32
    P = {
        # pre_conv: Conv(3x3, no bias) + BN + ReLU
        "w_pre":   0.1 * jax.random.normal(ks[0], (3, 3, in_dim, out_dim), f32),
        "pre_bn_g": 1.0 + 0.1 * jax.random.normal(ks[1], (out_dim,), f32),
        "pre_bn_b": 0.05 * jax.random.normal(ks[2], (out_dim,), f32),
        "pre_bn_m": 0.05 * jax.random.normal(ks[3], (out_dim,), f32),
        "pre_bn_v": 1.0 + 0.1 * jnp.abs(jax.random.normal(ks[4], (out_dim,), f32)),
        # 1x1 query / key / value convs (with bias)
        "wq": 0.2 * jax.random.normal(ks[5], (out_dim, cq), f32),
        "bq": 0.05 * jax.random.normal(ks[6], (cq,), f32),
        "wk": 0.2 * jax.random.normal(ks[7], (out_dim, cq), f32),
        "bk": 0.05 * jax.random.normal(ks[8], (cq,), f32),
        "wv": 0.2 * jax.random.normal(ks[9], (out_dim, out_dim), f32),
        "bv": 0.05 * jax.random.normal(ks[10], (out_dim,), f32),
        # gamma initialized to zeros(1) in PyTorch; use a nonzero deterministic
        # value so the attention path is actually exercised.
        "gamma": jnp.array([0.5], f32),
        # final_conv: Conv(3x3, no bias) + BN + ReLU
        "w_fin":   0.1 * jax.random.normal(ks[11], (3, 3, out_dim, out_dim), f32),
        "fin_bn_g": jnp.ones((out_dim,), f32),
        "fin_bn_b": jnp.zeros((out_dim,), f32),
        "fin_bn_m": jnp.zeros((out_dim,), f32),
        "fin_bn_v": jnp.ones((out_dim,), f32),
    }
    return P


if __name__ == "__main__":
    key = jax.random.PRNGKey(0)
    kx, kp = jax.random.split(key)

    B, in_dim, H, W = 2, 4, 16, 16
    out_dim, ratio = 8, 4

    x = jax.random.normal(kx, (B, in_dim, H, W), jnp.float32)
    P = make_params(kp, in_dim, out_dim, ratio)

    out_feat, attn = attention_layer_forward(x, P, pos=None)
    jax.block_until_ready((out_feat, attn))

    assert out_feat.shape == (B, out_dim, H, W)
    assert attn.shape == (B, H * W, H * W)

    ref_feat, ref_attn = reference(x, P, pos=None)
    # bf16 MXU operands + bf16 intermediate activations / attention storage + the EUP
    # approx reciprocal trade precision for throughput; tolerances reflect that
    # (row max/sum and all accumulations stay f32).
    assert jnp.allclose(out_feat, ref_feat, rtol=3e-2, atol=3e-2), "out_feat mismatch"
    assert jnp.allclose(attn.astype(jnp.float32), ref_attn,
                        rtol=3e-2, atol=5e-4), "attention mismatch"

    print("KERNEL_OK")
</pallas_src>

<mosaic_0001>
module attributes {stable_mosaic.version = 11 : i64} {
  func.func @_conv3x3_bn_relu_kernel(%arg0: i32, %arg1: i32, %arg2: memref<1x18x16x128xbf16, #tpu.memory_space<vmem>>, %arg3: memref<3x128x128xbf16, #tpu.memory_space<vmem>>, %arg4: memref<1x128xf32, #tpu.memory_space<vmem>>, %arg5: memref<1x256x128xbf16, #tpu.memory_space<vmem>>) attributes {dimension_semantics = [#tpu.dimension_semantics<parallel>, #tpu.dimension_semantics<parallel>], iteration_bounds = array<i64: 2, 1>, scalar_prefetch = 0 : i64, scratch_operands = 0 : i64, tpu.core_type = #tpu.core_type<tc>, window_params = [{transform_indices = @transform_0, window_bounds = array<i64: 1, 18, 16, 128>}, {pipeline_mode = #tpu.pipeline_mode<synchronous>, transform_indices = @transform_1, window_bounds = array<i64: 3, 128, 128>}, {pipeline_mode = #tpu.pipeline_mode<synchronous>, transform_indices = @transform_2, window_bounds = array<i64: 1, 128>}, {transform_indices = @transform_3, window_bounds = array<i64: 1, 256, 128>}]} {
    %c16_i32 = arith.constant 16 : i32
    %0 = arith.muli %arg1, %c16_i32 : i32
    %1 = tpu.assume_multiple %0, 16 : i32
    %cst = arith.constant 0.000000e+00 : f32
    %2 = vector.broadcast %cst : f32 to vector<256x128xf32>
    %c0_i32 = arith.constant 0 : i32
    %3 = arith.addi %1, %c0_i32 : i32
    %c0 = arith.constant 0 : index
    %4 = arith.index_cast %3 : i32 to index
    %c0_0 = arith.constant 0 : index
    %c0_1 = arith.constant 0 : index
    %5 = vector.load %arg2[%c0, %4, %c0_0, %c0_1] : memref<1x18x16x128xbf16, #tpu.memory_space<vmem>>, vector<1x16x16x128xbf16>
    %6 = vector.shape_cast %5 : vector<1x16x16x128xbf16> to vector<16x16x128xbf16>
    %7 = vector.shape_cast %6 : vector<16x16x128xbf16> to vector<256x128xbf16>
    %c0_2 = arith.constant 0 : index
    %c0_3 = arith.constant 0 : index
    %c0_4 = arith.constant 0 : index
    %8 = vector.load %arg3[%c0_2, %c0_3, %c0_4] : memref<3x128x128xbf16, #tpu.memory_space<vmem>>, vector<1x128x128xbf16>
    %9 = vector.shape_cast %8 : vector<1x128x128xbf16> to vector<128x128xbf16>
    %cst_5 = arith.constant dense<0.000000e+00> : vector<256x128xf32>
    %10 = tpu.matmul %7, %9, %cst_5 {dimension_numbers = #tpu.dot_dimension_numbers<[1], [0], [0], [1], [0, 0, 1, 1], [], []>} : vector<256x128xbf16>, vector<128x128xbf16>, vector<256x128xf32> -> vector<256x128xf32>
    %11 = arith.addf %2, %10 : vector<256x128xf32>
    %c1_i32 = arith.constant 1 : i32
    %12 = arith.addi %1, %c1_i32 : i32
    %c0_6 = arith.constant 0 : index
    %13 = arith.index_cast %12 : i32 to index
    %c0_7 = arith.constant 0 : index
    %c0_8 = arith.constant 0 : index
    %14 = vector.load %arg2[%c0_6, %13, %c0_7, %c0_8] : memref<1x18x16x128xbf16, #tpu.memory_space<vmem>>, vector<1x16x16x128xbf16>
    %15 = vector.shape_cast %14 : vector<1x16x16x128xbf16> to vector<16x16x128xbf16>
    %16 = vector.shape_cast %15 : vector<16x16x128xbf16> to vector<256x128xbf16>
    %c1 = arith.constant 1 : index
    %c0_9 = arith.constant 0 : index
    %c0_10 = arith.constant 0 : index
    %17 = vector.load %arg3[%c1, %c0_9, %c0_10] : memref<3x128x128xbf16, #tpu.memory_space<vmem>>, vector<1x128x128xbf16>
    %18 = vector.shape_cast %17 : vector<1x128x128xbf16> to vector<128x128xbf16>
    %cst_11 = arith.constant dense<0.000000e+00> : vector<256x128xf32>
    %19 = tpu.matmul %16, %18, %cst_11 {dimension_numbers = #tpu.dot_dimension_numbers<[1], [0], [0], [1], [0, 0, 1, 1], [], []>} : vector<256x128xbf16>, vector<128x128xbf16>, vector<256x128xf32> -> vector<256x128xf32>
    %20 = arith.addf %11, %19 : vector<256x128xf32>
    %c2_i32 = arith.constant 2 : i32
    %21 = arith.addi %1, %c2_i32 : i32
    %c0_12 = arith.constant 0 : index
    %22 = arith.index_cast %21 : i32 to index
    %c0_13 = arith.constant 0 : index
    %c0_14 = arith.constant 0 : index
    %23 = vector.load %arg2[%c0_12, %22, %c0_13, %c0_14] : memref<1x18x16x128xbf16, #tpu.memory_space<vmem>>, vector<1x16x16x128xbf16>
    %24 = vector.shape_cast %23 : vector<1x16x16x128xbf16> to vector<16x16x128xbf16>
    %25 = vector.shape_cast %24 : vector<16x16x128xbf16> to vector<256x128xbf16>
    %c2 = arith.constant 2 : index
    %c0_15 = arith.constant 0 : index
    %c0_16 = arith.constant 0 : index
    %26 = vector.load %arg3[%c2, %c0_15, %c0_16] : memref<3x128x128xbf16, #tpu.memory_space<vmem>>, vector<1x128x128xbf16>
    %27 = vector.shape_cast %26 : vector<1x128x128xbf16> to vector<128x128xbf16>
    %cst_17 = arith.constant dense<0.000000e+00> : vector<256x128xf32>
    %28 = tpu.matmul %25, %27, %cst_17 {dimension_numbers = #tpu.dot_dimension_numbers<[1], [0], [0], [1], [0, 0, 1, 1], [], []>} : vector<256x128xbf16>, vector<128x128xbf16>, vector<256x128xf32> -> vector<256x128xf32>
    %29 = arith.addf %20, %28 : vector<256x128xf32>
    %c0_18 = arith.constant 0 : index
    %c0_19 = arith.constant 0 : index
    %30 = vector.load %arg4[%c0_18, %c0_19] : memref<1x128xf32, #tpu.memory_space<vmem>>, vector<1x128xf32>
    %31 = vector.broadcast %30 : vector<1x128xf32> to vector<256x128xf32>
    %32 = arith.addf %29, %31 : vector<256x128xf32>
    %cst_20 = arith.constant 0.000000e+00 : f32
    %33 = vector.broadcast %cst_20 : f32 to vector<256x128xf32>
    %34 = arith.maximumf %32, %33 : vector<256x128xf32>
    %35 = arith.truncf %34 : vector<256x128xf32> to vector<256x128xbf16>
    %c0_21 = arith.constant 0 : index
    %c0_22 = arith.constant 0 : index
    %c0_23 = arith.constant 0 : index
    %36 = vector.load %arg5[%c0_21, %c0_22, %c0_23] : memref<1x256x128xbf16, #tpu.memory_space<vmem>>, vector<1x256x128xbf16>
    %37 = vector.shape_cast %36 : vector<1x256x128xbf16> to vector<256x128xbf16>
    %38 = vector.shape_cast %35 : vector<256x128xbf16> to vector<1x256x128xbf16>
    tpu.vector_store %arg5[%c0_21, %c0_22, %c0_23], %38 {strides = array<i32>} : memref<1x256x128xbf16, #tpu.memory_space<vmem>>, vector<1x256x128xbf16>,
    return
  }
  func.func @transform_0(%arg0: i32, %arg1: i32) -> (i32, i32, i32, i32) {
    %c0_i32 = arith.constant 0 : i32
    %c0_i32_0 = arith.constant 0 : i32
    %c0_i32_1 = arith.constant 0 : i32
    %c0_i32_2 = arith.constant 0 : i32
    return %arg0, %c0_i32, %c0_i32_0, %c0_i32_1 : i32, i32, i32, i32
  }
  func.func @transform_1(%arg0: i32, %arg1: i32) -> (i32, i32, i32) {
    %c0_i32 = arith.constant 0 : i32
    %c0_i32_0 = arith.constant 0 : i32
    %c0_i32_1 = arith.constant 0 : i32
    %c0_i32_2 = arith.constant 0 : i32
    return %c0_i32, %c0_i32_0, %c0_i32_1 : i32, i32, i32
  }
  func.func @transform_2(%arg0: i32, %arg1: i32) -> (i32, i32) {
    %c0_i32 = arith.constant 0 : i32
    %c0_i32_0 = arith.constant 0 : i32
    %c0_i32_1 = arith.constant 0 : i32
    return %c0_i32, %c0_i32_0 : i32, i32
  }
  func.func @transform_3(%arg0: i32, %arg1: i32) -> (i32, i32, i32) {
    %c0_i32 = arith.constant 0 : i32
    %c0_i32_0 = arith.constant 0 : i32
    return %arg0, %arg1, %c0_i32 : i32, i32, i32
  }
}

</mosaic_0001>

<llo_original>
// kernel: tpu_custom_call.1
$region0: #{tpu_custom_call.1}
  #allocation0 [shape = 'u32[]', space=smem, size = 0x4, offset = 0x4, fixed_abs, tag = 'smem constant byte address 0x4 - core index']
  #allocation1 [shape = 'u32[144,128]{1,0:T(1,128)}', space=vmem, size = 0x12000, scoped, tag = 'internal scratch']
  %s0 = inlined_call_operand.hbm [shape: bf16[2,18,16,128], index: 0, kind: input, shape index: {}]
  %s1 = inlined_call_operand.hbm [shape: bf16[3,128,128], index: 1, kind: input, shape index: {}]
  %s2 = inlined_call_operand.vmem [shape: f32[1,128], index: 2, kind: input, shape index: {}]
  %s3 = inlined_call_operand.hbm [shape: bf16[2,256,128], index: 3, kind: output, shape index: {}]
  %s4 = sld [smem:[#allocation0]]
  $region53: #{tpu_custom_call.1} parent=0
    _
  %s6 = ssub.s32 1, %s4
  %s7 = scalar_select 0, %s6, %s4
  $region1: #{tpu_custom_call.1} parent=0
    #allocation2 [shape = 'u8[147456]{0}', space=vmem, size = 0x24000, scoped, tag = 'input window, operand 0']
    #allocation3 [shape = 's32[2]{0}', space=sflag, size = 0x8, scoped, tag = 'scoped memory for tpu_custom_call.1']
    #allocation4 [shape = 's32[2]{0}', space=sflag, size = 0x8, scoped, tag = 'scoped memory for tpu_custom_call.1']
    #allocation5 [shape = 'u8[98304]{0}', space=vmem, size = 0x18000, scoped, tag = 'input window, operand 1, single buffered']
    #allocation6 [shape = 's32[1]{0}', space=sflag, size = 0x4, scoped, tag = 'scoped memory for tpu_custom_call.1']
    #allocation7 [shape = 'u8[131072]{0}', space=vmem, size = 0x20000, scoped, tag = 'output window, operand 0']
    %8 = vsyncpa [#allocation3], 0
    %s9 = scalar_lea.sflag [#allocation3], 1
    %10 = vsyncpa %s9, 0
    %11 = vsyncpa [#allocation6], 0
    %12 = vsyncpa [#allocation4], 0
    %s13 = scalar_lea.sflag [#allocation4], 1
    %14 = vsyncpa %s13, 0
    loop: start=0, step=1, limit=4
    $region2: #{tpu_custom_call.1} parent=1 // loop_pre_header
      _
    $region3: #{tpu_custom_call.1} parent=1 // loop_header
      %s16 = sphi 0, %s20
      %p17 = scmp.ge.s32.totalorder %s16, 4
      %s23 = sphi 0, %s35
      %s24 = sphi 0, %s31
      %s25 = sphi 0, %s23
      %s26 = sphi 0, %s24
      %s27 = sphi 0, %s25
      %s28 = sphi 0, %s26
      %s38 = sphi 0, %s40
      %s41 = sphi 0, %s38
      %s42 = sphi 0, %s41
      %s58 = sphi 0, %s42
      %s62 = sphi 0, %s62
      %s64 = sphi 0, %s62
      %s65 = sphi 0, %s64
      %s79 = sphi 0, %s65
      %s83 = sphi 0, %s83
      %s85 = sphi 0, %s83
      %s86 = sphi 0, %s85
      %s100 = sphi 0, %s86
      %s108 = sphi 0, %s110
      %s111 = sphi 0, %s108
      %s112 = sphi 0, %s111
      %s128 = sphi 0, %s112
    $region4: #{tpu_custom_call.1} parent=1 // loop_header_branch
      %19 = sbr.rel (%p17) target = $region8
    $region5: #{tpu_custom_call.1} parent=1 // loop_body
      %s21 = ssub.s32 %s16, 1
      %s22 = ssub.s32 %s16, 2
      %s29 = sadd.s32 1, %s24
      %p30 = scmp.ge.s32.totalorder %s29, 1
      %s31 = scalar_select %p30, 0, %s29
      %s32 = sadd.s32 1, %s23
      %s33 = scalar_select %p30, %s32, %s23
      %p34 = scmp.ge.s32.totalorder %s33, 2
      %s35 = scalar_select %p34, 0, %s33
      %s36 = ssub.s32 %s23, %s35
      %p37 = scmp.eq.s32.totalorder %s36, 0
      %s39 = sadd.s32 %s38, 1
      %s40 = scalar_select %p37, %s38, %s39
      %p43 = pneg %p37
      %p44 = scmp.eq.s32.totalorder %s16, 1
      %p45 = por %p43, %p44
      %p46 = scmp.ne.s32.totalorder %s38, %s41
      %p47 = scmp.eq.s32.totalorder %s16, 0
      %p48 = por %p46, %p47
      %p49 = scmp.ne.s32.totalorder %s38, %s41
      %p50 = scmp.eq.s32.totalorder %s21, 1
      %p51 = por %p49, %p50
      %p52 = scmp.ne.s32.totalorder %s41, %s42
      %p53 = scmp.eq.s32.totalorder %s21, 0
      %p54 = por %p52, %p53
      %p55 = scmp.ne.s32.totalorder %s41, %s42
      %p56 = scmp.eq.s32.totalorder %s22, 1
      %p57 = por %p55, %p56
      %p59 = scmp.ne.s32.totalorder %s42, %s58
      %p60 = scmp.eq.s32.totalorder %s22, 0
      %p61 = por %p59, %p60
      %s63 = sadd.s32 %s62, 1
      %p66 = scmp.eq.s32.totalorder %s16, 1
      %p67 = scmp.ne.s32.totalorder %s62, %s64
      %p68 = scmp.eq.s32.totalorder %s16, 0
      %p69 = por %p67, %p68
      %p70 = scmp.ne.s32.totalorder %s62, %s64
      %p71 = scmp.eq.s32.totalorder %s21, 1
      %p72 = por %p70, %p71
      %p73 = scmp.ne.s32.totalorder %s64, %s65
      %p74 = scmp.eq.s32.totalorder %s21, 0
      %p75 = por %p73, %p74
      %p76 = scmp.ne.s32.totalorder %s64, %s65
      %p77 = scmp.eq.s32.totalorder %s22, 1
      %p78 = por %p76, %p77
      %p80 = scmp.ne.s32.totalorder %s65, %s79
      %p81 = scmp.eq.s32.totalorder %s22, 0
      %p82 = por %p80, %p81
      %s84 = sadd.s32 %s83, 1
      %p87 = scmp.eq.s32.totalorder %s16, 1
      %p88 = scmp.ne.s32.totalorder %s83, %s85
      %p89 = scmp.eq.s32.totalorder %s16, 0
      %p90 = por %p88, %p89
      %p91 = scmp.ne.s32.totalorder %s83, %s85
      %p92 = scmp.eq.s32.totalorder %s21, 1
      %p93 = por %p91, %p92
      %p94 = scmp.ne.s32.totalorder %s85, %s86
      %p95 = scmp.eq.s32.totalorder %s21, 0
      %p96 = por %p94, %p95
      %p97 = scmp.ne.s32.totalorder %s85, %s86
      %p98 = scmp.eq.s32.totalorder %s22, 1
      %p99 = por %p97, %p98
      %p101 = scmp.ne.s32.totalorder %s86, %s100
      %p102 = scmp.eq.s32.totalorder %s22, 0
      %p103 = por %p101, %p102
      %s104 = ssub.s32 %s23, %s35
      %s105 = ssub.s32 %s24, %s31
      %s106 = sor.u32 %s104, %s105
      %p107 = scmp.eq.s32.totalorder %s106, 0
      %s109 = sadd.s32 %s108, 1
      %s110 = scalar_select %p107, %s108, %s109
      %p113 = pneg %p107
      %p114 = scmp.eq.s32.totalorder %s16, 1
      %p115 = por %p113, %p114
      %p116 = scmp.ne.s32.totalorder %s108, %s111
      %p117 = scmp.eq.s32.totalorder %s16, 0
      %p118 = por %p116, %p117
      %p119 = scmp.ne.s32.totalorder %s108, %s111
      %p120 = scmp.eq.s32.totalorder %s21, 1
      %p121 = por %p119, %p120
      %p122 = scmp.ne.s32.totalorder %s111, %s112
      %p123 = scmp.eq.s32.totalorder %s21, 0
      %p124 = por %p122, %p123
      %p125 = scmp.ne.s32.totalorder %s111, %s112
      %p126 = scmp.eq.s32.totalorder %s22, 1
      %p127 = por %p125, %p126
      %p129 = scmp.ne.s32.totalorder %s112, %s128
      %p130 = scmp.eq.s32.totalorder %s22, 0
      %p131 = por %p129, %p130
      %p132 = scmp.le.s32.totalorder 1, %s16
      %p133 = scmp.lt.s32.totalorder %s16, 3
      %p134 = pnand %p132, %p133
      %p135 = pneg %p134
      // Predicated region
      $region9: #{tpu_custom_call.1} parent=5 // pred_check
        _
      $region10: #{tpu_custom_call.1} parent=5 // pred_check_branch
        %137 = sbr.rel (%p134) target = $region12
      $region11: #{tpu_custom_call.1} parent=5 // pred_region
        %s138 = ssub.s32 %s16, 1
        // Predicated region
        $region13: #{tpu_custom_call.1} parent=11 // pred_check
          %p139 = pneg %p75
        $region14: #{tpu_custom_call.1} parent=11 // pred_check_branch
          %141 = sbr.rel (%p139) target = $region16
        $region15: #{tpu_custom_call.1} parent=11 // pred_region
          %s143 = ssub.s32 3072, 3072
          %144 = vsyncadd [#allocation6], %s143
          %s145 = sshll.u32 [#allocation5], 4
          %s146 = int_to_ptr.vmem [resolvable:$true] %s145
          %151 = dma.hbm_to_vmem [thread:$0]  %s1, 3072, %s146, [#allocation6], 64, 64, 4
        $region16: #{tpu_custom_call.1} parent=11 // pred_fallthru
          _
        // Predicated region
        $region17: #{tpu_custom_call.1} parent=11 // pred_check
          %p152 = pneg %p96
        $region18: #{tpu_custom_call.1} parent=11 // pred_check_branch
          %154 = sbr.rel (%p152) target = $region20
        $region19: #{tpu_custom_call.1} parent=11 // pred_region
          _
        $region20: #{tpu_custom_call.1} parent=11 // pred_fallthru
          _
      $region12: #{tpu_custom_call.1} parent=5 // pred_fallthru
        _
      %p155 = scmp.lt.s32.totalorder %s16, 2
      // Predicated region
      $region21: #{tpu_custom_call.1} parent=5 // pred_check
        %p156 = pneg %p155
      $region22: #{tpu_custom_call.1} parent=5 // pred_check_branch
        %158 = sbr.rel (%p156) target = $region24
      $region23: #{tpu_custom_call.1} parent=5 // pred_region
        // Predicated region
        $region25: #{tpu_custom_call.1} parent=23 // pred_check
          %p159 = pneg %p48
        $region26: #{tpu_custom_call.1} parent=23 // pred_check_branch
          %161 = sbr.rel (%p159) target = $region28
        $region27: #{tpu_custom_call.1} parent=23 // pred_region
          %s162 = sand.u32 %s38, 1
          %s163 = scalar_lea.sflag [#allocation3], %s162
          %s164 = sand.u32 %s38, 1
          %s165 = smul.addr %s164, 144
          %s166 = scalar_lea.vmem [#allocation2], %s165
          %s168 = ssub.s32 2304, 2304
          %169 = vsyncadd %s163, %s168
          %s170 = smul.addr %s23, 36
          %s171 = smul.addr %s170, 64
          %s172 = scalar_lea.hbm %s0, %s171
          %s173 = sshll.u32 %s166, 4
          %s174 = int_to_ptr.vmem [resolvable:$true] %s173
          %179 = dma.hbm_to_vmem [thread:$0]  %s172, 2304, %s174, %s163, 64, 64, 4
        $region28: #{tpu_custom_call.1} parent=23 // pred_fallthru
          _
      $region24: #{tpu_custom_call.1} parent=5 // pred_fallthru
        _
      %p180 = scmp.le.s32.totalorder 1, %s16
      %p181 = scmp.lt.s32.totalorder %s16, 3
      %p182 = pnand %p180, %p181
      %p183 = pneg %p182
      // Predicated region
      $region29: #{tpu_custom_call.1} parent=5 // pred_check
        _
      $region30: #{tpu_custom_call.1} parent=5 // pred_check_branch
        %185 = sbr.rel (%p182) target = $region32
      $region31: #{tpu_custom_call.1} parent=5 // pred_region
        %s186 = ssub.s32 %s16, 1
        %s187 = sand.u32 %s41, 1
        %s188 = scalar_lea.sflag [#allocation3], %s187
        %s189 = sand.u32 %s41, 1
        %s190 = smul.addr %s189, 144
        %s191 = scalar_lea.vmem [#allocation2], %s190
        // Predicated region
        $region33: #{tpu_custom_call.1} parent=31 // pred_check
          %p192 = pneg %p54
        $region34: #{tpu_custom_call.1} parent=31 // pred_check_branch
          %194 = sbr.rel (%p192) target = $region36
        $region35: #{tpu_custom_call.1} parent=31 // pred_region
          %195 = dma.done %s188, 2304
        $region36: #{tpu_custom_call.1} parent=31 // pred_fallthru
          _
        // Predicated region
        $region37: #{tpu_custom_call.1} parent=31 // pred_check
          %p196 = pneg %p75
        $region38: #{tpu_custom_call.1} parent=31 // pred_check_branch
          %198 = sbr.rel (%p196) target = $region40
        $region39: #{tpu_custom_call.1} parent=31 // pred_region
          %199 = dma.done [#allocation6], 3072
        $region40: #{tpu_custom_call.1} parent=31 // pred_fallthru
          _
        %s200 = sand.u32 %s41, 1
        %s201 = scalar_lea.sflag [#allocation3], %s200
        %s202 = sand.u32 %s41, 1
        %s203 = smul.addr %s202, 144
        %s204 = scalar_lea.vmem [#allocation2], %s203
        %p205 = pneg %p54
        %p206 = pneg %p51
        %p207 = pneg %p75
        %p208 = pneg %p72
        %p209 = pneg %p96
        %p210 = pneg %p93
        %p211 = pneg %p124
        %p212 = pneg %p121
        %s213 = sand.u32 %s111, 1
        %s214 = scalar_lea.sflag [#allocation4], %s213
        %s215 = sand.u32 %s111, 1
        %s216 = smul.addr %s215, 128
        %s217 = scalar_lea.vmem [#allocation7], %s216
        %s218 = smul.u32 32, %s26
        %s220 = smul.u32 %s26, 16
        %s221 = smul.u32 %s220, 2
        %s222 = smul.addr %s221, 4
        %s223 = scalar_lea.vmem %s191, %s222 [#allocation2]
        %v224 = vld [vmem:[%s223] sm:$0xf]
        %v225 = vld [vmem:[%s223 + $0x4] sm:$0xf]
        %v226 = vld [vmem:[%s223 + $0x8] sm:$0xf]
        %v227 = vld [vmem:[%s223 + $0xc] sm:$0xf]
        %v228 = vld [vmem:[%s223 + $0x10] sm:$0xf]
        %v229 = vld [vmem:[%s223 + $0x14] sm:$0xf]
        %v230 = vld [vmem:[%s223 + $0x18] sm:$0xf]
        %v231 = vld [vmem:[%s223 + $0x1c] sm:$0xf]
        %v232 = vld [vmem:[%s223 + $0x20] sm:$0xf]
        %v233 = vld [vmem:[%s223 + $0x24] sm:$0xf]
        %v234 = vld [vmem:[%s223 + $0x28] sm:$0xf]
        %v235 = vld [vmem:[%s223 + $0x2c] sm:$0xf]
        %v236 = vld [vmem:[%s223 + $0x30] sm:$0xf]
        %v237 = vld [vmem:[%s223 + $0x34] sm:$0xf]
        %v238 = vld [vmem:[%s223 + $0x38] sm:$0xf]
        %v239 = vld [vmem:[%s223 + $0x3c] sm:$0xf]
        %v240 = vld [vmem:[%s223 + $0x40] sm:$0xf]
        %v241 = vld [vmem:[%s223 + $0x44] sm:$0xf]
        %v242 = vld [vmem:[%s223 + $0x48] sm:$0xf]
        %v243 = vld [vmem:[%s223 + $0x4c] sm:$0xf]
        %v244 = vld [vmem:[%s223 + $0x50] sm:$0xf]
        %v245 = vld [vmem:[%s223 + $0x54] sm:$0xf]
        %v246 = vld [vmem:[%s223 + $0x58] sm:$0xf]
        %v247 = vld [vmem:[%s223 + $0x5c] sm:$0xf]
        %v248 = vld [vmem:[%s223 + $0x60] sm:$0xf]
        %v249 = vld [vmem:[%s223 + $0x64] sm:$0xf]
        %v250 = vld [vmem:[%s223 + $0x68] sm:$0xf]
        %v251 = vld [vmem:[%s223 + $0x6c] sm:$0xf]
        %v252 = vld [vmem:[%s223 + $0x70] sm:$0xf]
        %v253 = vld [vmem:[%s223 + $0x74] sm:$0xf]
        %v254 = vld [vmem:[%s223 + $0x78] sm:$0xf]
        %v255 = vld [vmem:[%s223 + $0x7c] sm:$0xf]
        %v256 = vld [vmem:[#allocation5] sm:$0xf]
        %v257 = vld [vmem:[#allocation5 + $0x4] sm:$0xf]
        %v258 = vld [vmem:[#allocation5 + $0x8] sm:$0xf]
        %v259 = vld [vmem:[#allocation5 + $0xc] sm:$0xf]
        %v260 = vld [vmem:[#allocation5 + $0x10] sm:$0xf]
        %v261 = vld [vmem:[#allocation5 + $0x14] sm:$0xf]
        %v262 = vld [vmem:[#allocation5 + $0x18] sm:$0xf]
        %v263 = vld [vmem:[#allocation5 + $0x1c] sm:$0xf]
        %v264 = vld [vmem:[#allocation5 + $0x20] sm:$0xf]
        %v265 = vld [vmem:[#allocation5 + $0x24] sm:$0xf]
        %v266 = vld [vmem:[#allocation5 + $0x28] sm:$0xf]
        %v267 = vld [vmem:[#allocation5 + $0x2c] sm:$0xf]
        %v268 = vld [vmem:[#allocation5 + $0x30] sm:$0xf]
        %v269 = vld [vmem:[#allocation5 + $0x34] sm:$0xf]
        %v270 = vld [vmem:[#allocation5 + $0x38] sm:$0xf]
        %v271 = vld [vmem:[#allocation5 + $0x3c] sm:$0xf]
        %s272 = sadd.s32 %s220, 1
        %s273 = smul.u32 %s272, 2
        %s274 = smul.addr %s273, 4
        %s275 = scalar_lea.vmem %s191, %s274 [#allocation2]
        %v276 = vld [vmem:[%s275] sm:$0xf]
        %v277 = vld [vmem:[%s275 + $0x4] sm:$0xf]
        %v278 = vld [vmem:[%s275 + $0x8] sm:$0xf]
        %v279 = vld [vmem:[%s275 + $0xc] sm:$0xf]
        %v280 = vld [vmem:[%s275 + $0x10] sm:$0xf]
        %v281 = vld [vmem:[%s275 + $0x14] sm:$0xf]
        %v282 = vld [vmem:[%s275 + $0x18] sm:$0xf]
        %v283 = vld [vmem:[%s275 + $0x1c] sm:$0xf]
        %v284 = vld [vmem:[%s275 + $0x20] sm:$0xf]
        %v285 = vld [vmem:[%s275 + $0x24] sm:$0xf]
        %v286 = vld [vmem:[%s275 + $0x28] sm:$0xf]
        %v287 = vld [vmem:[%s275 + $0x2c] sm:$0xf]
        %v288 = vld [vmem:[%s275 + $0x30] sm:$0xf]
        %v289 = vld [vmem:[%s275 + $0x34] sm:$0xf]
        %v290 = vld [vmem:[%s275 + $0x38] sm:$0xf]
        %v291 = vld [vmem:[%s275 + $0x3c] sm:$0xf]
        %v292 = vld [vmem:[%s275 + $0x40] sm:$0xf]
        %v293 = vld [vmem:[%s275 + $0x44] sm:$0xf]
        %v294 = vld [vmem:[%s275 + $0x48] sm:$0xf]
        %v295 = vld [vmem:[%s275 + $0x4c] sm:$0xf]
        %v296 = vld [vmem:[%s275 + $0x50] sm:$0xf]
        %v297 = vld [vmem:[%s275 + $0x54] sm:$0xf]
        %v298 = vld [vmem:[%s275 + $0x58] sm:$0xf]
        %v299 = vld [vmem:[%s275 + $0x5c] sm:$0xf]
        %v300 = vld [vmem:[%s275 + $0x60] sm:$0xf]
        %v301 = vld [vmem:[%s275 + $0x64] sm:$0xf]
        %v302 = vld [vmem:[%s275 + $0x68] sm:$0xf]
        %v303 = vld [vmem:[%s275 + $0x6c] sm:$0xf]
        %v304 = vld [vmem:[%s275 + $0x70] sm:$0xf]
        %v305 = vld [vmem:[%s275 + $0x74] sm:$0xf]
        %v306 = vld [vmem:[%s275 + $0x78] sm:$0xf]
        %v307 = vld [vmem:[%s275 + $0x7c] sm:$0xf]
        %s308 = scalar_lea.vmem [#allocation5], 64
        %v309 = vld [vmem:[%s308] sm:$0xf]
        %v310 = vld [vmem:[%s308 + $0x4] sm:$0xf]
        %v311 = vld [vmem:[%s308 + $0x8] sm:$0xf]
        %v312 = vld [vmem:[%s308 + $0xc] sm:$0xf]
        %v313 = vld [vmem:[%s308 + $0x10] sm:$0xf]
        %v314 = vld [vmem:[%s308 + $0x14] sm:$0xf]
        %v315 = vld [vmem:[%s308 + $0x18] sm:$0xf]
        %v316 = vld [vmem:[%s308 + $0x1c] sm:$0xf]
        %v317 = vld [vmem:[%s308 + $0x20] sm:$0xf]
        %v318 = vld [vmem:[%s308 + $0x24] sm:$0xf]
        %v319 = vld [vmem:[%s308 + $0x28] sm:$0xf]
        %v320 = vld [vmem:[%s308 + $0x2c] sm:$0xf]
        %v321 = vld [vmem:[%s308 + $0x30] sm:$0xf]
        %v322 = vld [vmem:[%s308 + $0x34] sm:$0xf]
        %v323 = vld [vmem:[%s308 + $0x38] sm:$0xf]
        %v324 = vld [vmem:[%s308 + $0x3c] sm:$0xf]
        %v357 = vunpack.c.l.b16 %v276
        %v358 = vunpack.c.l.b16 %v277
        %v359 = vunpack.c.l.b16 %v278
        %v360 = vunpack.c.l.b16 %v279
        %v361 = vunpack.c.l.b16 %v280
        %v362 = vunpack.c.l.b16 %v281
        %v363 = vunpack.c.l.b16 %v282
        %v364 = vunpack.c.l.b16 %v283
        %v365 = vunpack.c.l.b16 %v284
        %v366 = vunpack.c.l.b16 %v285
        %v367 = vunpack.c.l.b16 %v286
        %v368 = vunpack.c.l.b16 %v287
        %v369 = vunpack.c.l.b16 %v288
        %v370 = vunpack.c.l.b16 %v289
        %v371 = vunpack.c.l.b16 %v290
        %v372 = vunpack.c.l.b16 %v291
        %v373 = vunpack.c.l.b16 %v292
        %v374 = vunpack.c.l.b16 %v293
        %v375 = vunpack.c.l.b16 %v294
        %v376 = vunpack.c.l.b16 %v295
        %v377 = vunpack.c.l.b16 %v296
        %v378 = vunpack.c.l.b16 %v297
        %v379 = vunpack.c.l.b16 %v298
        %v380 = vunpack.c.l.b16 %v299
        %v381 = vunpack.c.l.b16 %v300
        %v382 = vunpack.c.l.b16 %v301
        %v383 = vunpack.c.l.b16 %v302
        %v384 = vunpack.c.l.b16 %v303
        %v385 = vunpack.c.l.b16 %v304
        %v386 = vunpack.c.l.b16 %v305
        %v387 = vunpack.c.l.b16 %v306
        %v388 = vunpack.c.l.b16 %v307
        %v389 = vpack.c.b16 %v358, %v357
        %v390 = vpack.c.b16 %v360, %v359
        %v391 = vpack.c.b16 %v362, %v361
        %v392 = vpack.c.b16 %v364, %v363
        %v393 = vpack.c.b16 %v366, %v365
        %v394 = vpack.c.b16 %v368, %v367
        %v395 = vpack.c.b16 %v370, %v369
        %v396 = vpack.c.b16 %v372, %v371
        %v397 = vpack.c.b16 %v374, %v373
        %v398 = vpack.c.b16 %v376, %v375
        %v399 = vpack.c.b16 %v378, %v377
        %v400 = vpack.c.b16 %v380, %v379
        %v401 = vpack.c.b16 %v382, %v381
        %v402 = vpack.c.b16 %v384, %v383
        %v403 = vpack.c.b16 %v386, %v385
        %v404 = vpack.c.b16 %v388, %v387
        %v437 = vunpack.c.l.b16 %v309
        %v438 = vunpack.c.l.b16 %v310
        %v439 = vunpack.c.l.b16 %v311
        %v440 = vunpack.c.l.b16 %v312
        %v441 = vunpack.c.l.b16 %v313
        %v442 = vunpack.c.l.b16 %v314
        %v443 = vunpack.c.l.b16 %v315
        %v444 = vunpack.c.l.b16 %v316
        %v445 = vunpack.c.l.b16 %v317
        %v446 = vunpack.c.l.b16 %v318
        %v447 = vunpack.c.l.b16 %v319
        %v448 = vunpack.c.l.b16 %v320
        %v449 = vunpack.c.l.b16 %v321
        %v450 = vunpack.c.l.b16 %v322
        %v451 = vunpack.c.l.b16 %v323
        %v452 = vunpack.c.l.b16 %v324
        %v453 = vpack.c.b16 %v438, %v437
        %v454 = vpack.c.b16 %v440, %v439
        %v455 = vpack.c.b16 %v442, %v441
        %v456 = vpack.c.b16 %v444, %v443
        %v457 = vpack.c.b16 %v446, %v445
        %v458 = vpack.c.b16 %v448, %v447
        %v459 = vpack.c.b16 %v450, %v449
        %v460 = vpack.c.b16 %v452, %v451
        %469 = vmatprep.subr.bf16.mxu0 0
        %470 = vmatpush1.bf16.msra.mxu0 %v460
        %471 = vmatprep.subr.bf16.mxu0 0
        %472 = vmatpush1.bf16.msra.mxu0 %v459
        %473 = vmatprep.subr.bf16.mxu0 0
        %474 = vmatpush1.bf16.msra.mxu0 %v458
        %475 = vmatprep.subr.bf16.mxu0 0
        %476 = vmatpush1.bf16.msra.mxu0 %v457
        %477 = vmatprep.subr.bf16.mxu0 0
        %478 = vmatpush1.bf16.msra.mxu0 %v456
        %479 = vmatprep.subr.bf16.mxu0 0
        %480 = vmatpush1.bf16.msra.mxu0 %v455
        %481 = vmatprep.subr.bf16.mxu0 0
        %482 = vmatpush1.bf16.msra.mxu0 %v454
        %483 = vmatprep.subr.bf16.mxu0 0
        %484 = vmatpush1.bf16.msra.mxu0 %v453
        %485 = vmatprep.subr.bf16.mxu0 0
        %486 = vmatpush2.bf16.msra.mxu0 0
        %487 = vmatprep.subr.bf16.mxu0 0
        %488 = vmatpush2.bf16.msra.mxu0 0
        %489 = vmatprep.subr.bf16.mxu0 0
        %490 = vmatpush2.bf16.msra.mxu0 0
        %491 = vmatprep.subr.bf16.mxu0 0
        %492 = vmatpush2.bf16.msra.mxu0 0
        %493 = vmatprep.subr.bf16.mxu0 0
        %494 = vmatpush2.bf16.msra.mxu0 0
        %495 = vmatprep.subr.bf16.mxu0 0
        %496 = vmatpush2.bf16.msra.mxu0 0
        %497 = vmatprep.subr.bf16.mxu0 0
        %498 = vmatpush2.bf16.msra.mxu0 0
        %499 = vmatprep.subr.bf16.mxu0 0
        %500 = vmatpush2.bf16.msra.mxu0 0
        %501 = vmatprep.mubr.bf16.mxu0 0
        %502 = vmatmul.mubr.bf16.gmra.mxu0 %v389
        %v503 = vpop.f32.mrf.mxu0
        %v504 = vadd.f32 0.0, %v503
        %v505 = vpop.f32.mrf.mxu0
        %v506 = vpop.f32.mrf.mxu0
        %v507 = vadd.f32 0.0, %v506
        %v508 = vpop.f32.mrf.mxu0
        %509 = vmatprep.mubr.bf16.mxu0 0
        %510 = vmatmul.mubr.bf16.gmra.mxu0 %v390
        %v511 = vpop.f32.mrf.mxu0
        %v512 = vadd.f32 0.0, %v511
        %v513 = vpop.f32.mrf.mxu0
        %v514 = vpop.f32.mrf.mxu0
        %v515 = vadd.f32 0.0, %v514
        %v516 = vpop.f32.mrf.mxu0
        %517 = vmatprep.mubr.bf16.mxu0 0
        %518 = vmatmul.mubr.bf16.gmra.mxu0 %v391
        %v519 = vpop.f32.mrf.mxu0
        %v520 = vadd.f32 0.0, %v519
        %v521 = vpop.f32.mrf.mxu0
        %v522 = vpop.f32.mrf.mxu0
        %v523 = vadd.f32 0.0, %v522
        %v524 = vpop.f32.mrf.mxu0
        %525 = vmatprep.mubr.bf16.mxu0 0
        %526 = vmatmul.mubr.bf16.gmra.mxu0 %v392
        %v527 = vpop.f32.mrf.mxu0
        %v528 = vadd.f32 0.0, %v527
        %v529 = vpop.f32.mrf.mxu0
        %v530 = vpop.f32.mrf.mxu0
        %v531 = vadd.f32 0.0, %v530
        %v532 = vpop.f32.mrf.mxu0
        %533 = vmatprep.mubr.bf16.mxu0 0
        %534 = vmatmul.mubr.bf16.gmra.mxu0 %v393
        %v535 = vpop.f32.mrf.mxu0
        %v536 = vadd.f32 0.0, %v535
        %v537 = vpop.f32.mrf.mxu0
        %v538 = vpop.f32.mrf.mxu0
        %v539 = vadd.f32 0.0, %v538
        %v540 = vpop.f32.mrf.mxu0
        %541 = vmatprep.mubr.bf16.mxu0 0
        %542 = vmatmul.mubr.bf16.gmra.mxu0 %v394
        %v543 = vpop.f32.mrf.mxu0
        %v544 = vadd.f32 0.0, %v543
        %v545 = vpop.f32.mrf.mxu0
        %v546 = vpop.f32.mrf.mxu0
        %v547 = vadd.f32 0.0, %v546
        %v548 = vpop.f32.mrf.mxu0
        %549 = vmatprep.mubr.bf16.mxu0 0
        %550 = vmatmul.mubr.bf16.gmra.mxu0 %v395
        %v551 = vpop.f32.mrf.mxu0
        %v552 = vadd.f32 0.0, %v551
        %v553 = vpop.f32.mrf.mxu0
        %v554 = vpop.f32.mrf.mxu0
        %v555 = vadd.f32 0.0, %v554
        %v556 = vpop.f32.mrf.mxu0
        %557 = vmatprep.mubr.bf16.mxu0 0
        %558 = vmatmul.mubr.bf16.gmra.mxu0 %v396
        %v559 = vpop.f32.mrf.mxu0
        %v560 = vadd.f32 0.0, %v559
        %v561 = vpop.f32.mrf.mxu0
        %v562 = vpop.f32.mrf.mxu0
        %v563 = vadd.f32 0.0, %v562
        %v564 = vpop.f32.mrf.mxu0
        %565 = vmatprep.mubr.bf16.mxu0 0
        %566 = vmatmul.mubr.bf16.gmra.mxu0 %v397
        %v567 = vpop.f32.mrf.mxu0
        %v568 = vadd.f32 0.0, %v567
        %v569 = vpop.f32.mrf.mxu0
        %v570 = vpop.f32.mrf.mxu0
        %v571 = vadd.f32 0.0, %v570
        %v572 = vpop.f32.mrf.mxu0
        %573 = vmatprep.mubr.bf16.mxu0 0
        %574 = vmatmul.mubr.bf16.gmra.mxu0 %v398
        %v575 = vpop.f32.mrf.mxu0
        %v576 = vadd.f32 0.0, %v575
        %v577 = vpop.f32.mrf.mxu0
        %v578 = vpop.f32.mrf.mxu0
        %v579 = vadd.f32 0.0, %v578
        %v580 = vpop.f32.mrf.mxu0
        %581 = vmatprep.mubr.bf16.mxu0 0
        %582 = vmatmul.mubr.bf16.gmra.mxu0 %v399
        %v583 = vpop.f32.mrf.mxu0
        %v584 = vadd.f32 0.0, %v583
        %v585 = vpop.f32.mrf.mxu0
        %v586 = vpop.f32.mrf.mxu0
        %v587 = vadd.f32 0.0, %v586
        %v588 = vpop.f32.mrf.mxu0
        %589 = vmatprep.mubr.bf16.mxu0 0
        %590 = vmatmul.mubr.bf16.gmra.mxu0 %v400
        %v591 = vpop.f32.mrf.mxu0
        %v592 = vadd.f32 0.0, %v591
        %v593 = vpop.f32.mrf.mxu0
        %v594 = vpop.f32.mrf.mxu0
        %v595 = vadd.f32 0.0, %v594
        %v596 = vpop.f32.mrf.mxu0
        %597 = vmatprep.mubr.bf16.mxu0 0
        %598 = vmatmul.mubr.bf16.gmra.mxu0 %v401
        %v599 = vpop.f32.mrf.mxu0
        %v600 = vadd.f32 0.0, %v599
        %v601 = vpop.f32.mrf.mxu0
        %v602 = vpop.f32.mrf.mxu0
        %v603 = vadd.f32 0.0, %v602
        %v604 = vpop.f32.mrf.mxu0
        %605 = vmatprep.mubr.bf16.mxu0 0
        %606 = vmatmul.mubr.bf16.gmra.mxu0 %v402
        %v607 = vpop.f32.mrf.mxu0
        %v608 = vadd.f32 0.0, %v607
        %v609 = vpop.f32.mrf.mxu0
        %v610 = vpop.f32.mrf.mxu0
        %v611 = vadd.f32 0.0, %v610
        %v612 = vpop.f32.mrf.mxu0
        %613 = vmatprep.mubr.bf16.mxu0 0
        %614 = vmatmul.mubr.bf16.gmra.mxu0 %v403
        %v615 = vpop.f32.mrf.mxu0
        %v616 = vadd.f32 0.0, %v615
        %v617 = vpop.f32.mrf.mxu0
        %v618 = vpop.f32.mrf.mxu0
        %v619 = vadd.f32 0.0, %v618
        %v620 = vpop.f32.mrf.mxu0
        %621 = vmatprep.mubr.bf16.mxu0 0
        %622 = vmatmul.mubr.bf16.gmra.mxu0 %v404
        %v623 = vpop.f32.mrf.mxu0
        %v624 = vadd.f32 0.0, %v623
        %v625 = vpop.f32.mrf.mxu0
        %v626 = vpop.f32.mrf.mxu0
        %v627 = vadd.f32 0.0, %v626
        %v628 = vpop.f32.mrf.mxu0
        %629 = vdwg.mxu0
        %v662 = vunpack.c.l.b16 %v224
        %v663 = vunpack.c.l.b16 %v225
        %v664 = vunpack.c.l.b16 %v226
        %v665 = vunpack.c.l.b16 %v227
        %v666 = vunpack.c.l.b16 %v228
        %v667 = vunpack.c.l.b16 %v229
        %v668 = vunpack.c.l.b16 %v230
        %v669 = vunpack.c.l.b16 %v231
        %v670 = vunpack.c.l.b16 %v232
        %v671 = vunpack.c.l.b16 %v233
        %v672 = vunpack.c.l.b16 %v234
        %v673 = vunpack.c.l.b16 %v235
        %v674 = vunpack.c.l.b16 %v236
        %v675 = vunpack.c.l.b16 %v237
        %v676 = vunpack.c.l.b16 %v238
        %v677 = vunpack.c.l.b16 %v239
        %v678 = vunpack.c.l.b16 %v240
        %v679 = vunpack.c.l.b16 %v241
        %v680 = vunpack.c.l.b16 %v242
        %v681 = vunpack.c.l.b16 %v243
        %v682 = vunpack.c.l.b16 %v244
        %v683 = vunpack.c.l.b16 %v245
        %v684 = vunpack.c.l.b16 %v246
        %v685 = vunpack.c.l.b16 %v247
        %v686 = vunpack.c.l.b16 %v248
        %v687 = vunpack.c.l.b16 %v249
        %v688 = vunpack.c.l.b16 %v250
        %v689 = vunpack.c.l.b16 %v251
        %v690 = vunpack.c.l.b16 %v252
        %v691 = vunpack.c.l.b16 %v253
        %v692 = vunpack.c.l.b16 %v254
        %v693 = vunpack.c.l.b16 %v255
        %v694 = vpack.c.b16 %v663, %v662
        %v695 = vpack.c.b16 %v665, %v664
        %v696 = vpack.c.b16 %v667, %v666
        %v697 = vpack.c.b16 %v669, %v668
        %v698 = vpack.c.b16 %v671, %v670
        %v699 = vpack.c.b16 %v673, %v672
        %v700 = vpack.c.b16 %v675, %v674
        %v701 = vpack.c.b16 %v677, %v676
        %v702 = vpack.c.b16 %v679, %v678
        %v703 = vpack.c.b16 %v681, %v680
        %v704 = vpack.c.b16 %v683, %v682
        %v705 = vpack.c.b16 %v685, %v684
        %v706 = vpack.c.b16 %v687, %v686
        %v707 = vpack.c.b16 %v689, %v688
        %v708 = vpack.c.b16 %v691, %v690
        %v709 = vpack.c.b16 %v693, %v692
        %v742 = vunpack.c.l.b16 %v256
        %v743 = vunpack.c.l.b16 %v257
        %v744 = vunpack.c.l.b16 %v258
        %v745 = vunpack.c.l.b16 %v259
        %v746 = vunpack.c.l.b16 %v260
        %v747 = vunpack.c.l.b16 %v261
        %v748 = vunpack.c.l.b16 %v262
        %v749 = vunpack.c.l.b16 %v263
        %v750 = vunpack.c.l.b16 %v264
        %v751 = vunpack.c.l.b16 %v265
        %v752 = vunpack.c.l.b16 %v266
        %v753 = vunpack.c.l.b16 %v267
        %v754 = vunpack.c.l.b16 %v268
        %v755 = vunpack.c.l.b16 %v269
        %v756 = vunpack.c.l.b16 %v270
        %v757 = vunpack.c.l.b16 %v271
        %v758 = vpack.c.b16 %v743, %v742
        %v759 = vpack.c.b16 %v745, %v744
        %v760 = vpack.c.b16 %v747, %v746
        %v761 = vpack.c.b16 %v749, %v748
        %v762 = vpack.c.b16 %v751, %v750
        %v763 = vpack.c.b16 %v753, %v752
        %v764 = vpack.c.b16 %v755, %v754
        %v765 = vpack.c.b16 %v757, %v756
        %774 = vmatprep.subr.bf16.mxu0 0
        %775 = vmatpush1.bf16.msra.mxu0 %v765
        %776 = vmatprep.subr.bf16.mxu0 0
        %777 = vmatpush1.bf16.msra.mxu0 %v764
        %778 = vmatprep.subr.bf16.mxu0 0
        %779 = vmatpush1.bf16.msra.mxu0 %v763
        %780 = vmatprep.subr.bf16.mxu0 0
        %781 = vmatpush1.bf16.msra.mxu0 %v762
        %782 = vmatprep.subr.bf16.mxu0 0
        %783 = vmatpush1.bf16.msra.mxu0 %v761
        %784 = vmatprep.subr.bf16.mxu0 0
        %785 = vmatpush1.bf16.msra.mxu0 %v760
        %786 = vmatprep.subr.bf16.mxu0 0
        %787 = vmatpush1.bf16.msra.mxu0 %v759
        %788 = vmatprep.subr.bf16.mxu0 0
        %789 = vmatpush1.bf16.msra.mxu0 %v758
        %790 = vmatprep.subr.bf16.mxu0 0
        %791 = vmatpush2.bf16.msra.mxu0 0
        %792 = vmatprep.subr.bf16.mxu0 0
        %793 = vmatpush2.bf16.msra.mxu0 0
        %794 = vmatprep.subr.bf16.mxu0 0
        %795 = vmatpush2.bf16.msra.mxu0 0
        %796 = vmatprep.subr.bf16.mxu0 0
        %797 = vmatpush2.bf16.msra.mxu0 0
        %798 = vmatprep.subr.bf16.mxu0 0
        %799 = vmatpush2.bf16.msra.mxu0 0
        %800 = vmatprep.subr.bf16.mxu0 0
        %801 = vmatpush2.bf16.msra.mxu0 0
        %802 = vmatprep.subr.bf16.mxu0 0
        %803 = vmatpush2.bf16.msra.mxu0 0
        %804 = vmatprep.subr.bf16.mxu0 0
        %805 = vmatpush2.bf16.msra.mxu0 0
        %806 = vmatprep.mubr.bf16.mxu0 0
        %807 = vmatmul.mubr.bf16.gmra.mxu0 %v694
        %v808 = vpop.f32.mrf.mxu0
        %v809 = vadd.f32 %v504, %v808
        %v810 = vpop.f32.mrf.mxu0
        %v811 = vpop.f32.mrf.mxu0
        %v812 = vadd.f32 %v507, %v811
        %v813 = vpop.f32.mrf.mxu0
        %814 = vmatprep.mubr.bf16.mxu0 0
        %815 = vmatmul.mubr.bf16.gmra.mxu0 %v695
        %v816 = vpop.f32.mrf.mxu0
        %v817 = vadd.f32 %v512, %v816
        %v818 = vpop.f32.mrf.mxu0
        %v819 = vpop.f32.mrf.mxu0
        %v820 = vadd.f32 %v515, %v819
        %v821 = vpop.f32.mrf.mxu0
        %822 = vmatprep.mubr.bf16.mxu0 0
        %823 = vmatmul.mubr.bf16.gmra.mxu0 %v696
        %v824 = vpop.f32.mrf.mxu0
        %v825 = vadd.f32 %v520, %v824
        %v826 = vpop.f32.mrf.mxu0
        %v827 = vpop.f32.mrf.mxu0
        %v828 = vadd.f32 %v523, %v827
        %v829 = vpop.f32.mrf.mxu0
        %830 = vmatprep.mubr.bf16.mxu0 0
        %831 = vmatmul.mubr.bf16.gmra.mxu0 %v697
        %v832 = vpop.f32.mrf.mxu0
        %v833 = vadd.f32 %v528, %v832
        %v834 = vpop.f32.mrf.mxu0
        %v835 = vpop.f32.mrf.mxu0
        %v836 = vadd.f32 %v531, %v835
        %v837 = vpop.f32.mrf.mxu0
        %838 = vmatprep.mubr.bf16.mxu0 0
        %839 = vmatmul.mubr.bf16.gmra.mxu0 %v698
        %v840 = vpop.f32.mrf.mxu0
        %v841 = vadd.f32 %v536, %v840
        %v842 = vpop.f32.mrf.mxu0
        %v843 = vpop.f32.mrf.mxu0
        %v844 = vadd.f32 %v539, %v843
        %v845 = vpop.f32.mrf.mxu0
        %846 = vmatprep.mubr.bf16.mxu0 0
        %847 = vmatmul.mubr.bf16.gmra.mxu0 %v699
        %v848 = vpop.f32.mrf.mxu0
        %v849 = vadd.f32 %v544, %v848
        %v850 = vpop.f32.mrf.mxu0
        %v851 = vpop.f32.mrf.mxu0
        %v852 = vadd.f32 %v547, %v851
        %v853 = vpop.f32.mrf.mxu0
        %854 = vmatprep.mubr.bf16.mxu0 0
        %855 = vmatmul.mubr.bf16.gmra.mxu0 %v700
        %v856 = vpop.f32.mrf.mxu0
        %v857 = vadd.f32 %v552, %v856
        %v858 = vpop.f32.mrf.mxu0
        %v859 = vpop.f32.mrf.mxu0
        %v860 = vadd.f32 %v555, %v859
        %v861 = vpop.f32.mrf.mxu0
        %862 = vmatprep.mubr.bf16.mxu0 0
        %863 = vmatmul.mubr.bf16.gmra.mxu0 %v701
        %v864 = vpop.f32.mrf.mxu0
        %v865 = vadd.f32 %v560, %v864
        %v866 = vpop.f32.mrf.mxu0
        %v867 = vpop.f32.mrf.mxu0
        %v868 = vadd.f32 %v563, %v867
        %v869 = vpop.f32.mrf.mxu0
        %870 = vmatprep.mubr.bf16.mxu0 0
        %871 = vmatmul.mubr.bf16.gmra.mxu0 %v702
        %v872 = vpop.f32.mrf.mxu0
        %v873 = vadd.f32 %v568, %v872
        %v874 = vpop.f32.mrf.mxu0
        %v875 = vpop.f32.mrf.mxu0
        %v876 = vadd.f32 %v571, %v875
        %v877 = vpop.f32.mrf.mxu0
        %878 = vmatprep.mubr.bf16.mxu0 0
        %879 = vmatmul.mubr.bf16.gmra.mxu0 %v703
        %v880 = vpop.f32.mrf.mxu0
        %v881 = vadd.f32 %v576, %v880
        %v882 = vpop.f32.mrf.mxu0
        %v883 = vpop.f32.mrf.mxu0
        %v884 = vadd.f32 %v579, %v883
        %v885 = vpop.f32.mrf.mxu0
        %886 = vmatprep.mubr.bf16.mxu0 0
        %887 = vmatmul.mubr.bf16.gmra.mxu0 %v704
        %v888 = vpop.f32.mrf.mxu0
        %v889 = vadd.f32 %v584, %v888
        %v890 = vpop.f32.mrf.mxu0
        %v891 = vpop.f32.mrf.mxu0
        %v892 = vadd.f32 %v587, %v891
        %v893 = vpop.f32.mrf.mxu0
        %894 = vmatprep.mubr.bf16.mxu0 0
        %895 = vmatmul.mubr.bf16.gmra.mxu0 %v705
        %v896 = vpop.f32.mrf.mxu0
        %v897 = vadd.f32 %v592, %v896
        %v898 = vpop.f32.mrf.mxu0
        %v899 = vpop.f32.mrf.mxu0
        %v900 = vadd.f32 %v595, %v899
        %v901 = vpop.f32.mrf.mxu0
        %902 = vmatprep.mubr.bf16.mxu0 0
        %903 = vmatmul.mubr.bf16.gmra.mxu0 %v706
        %v904 = vpop.f32.mrf.mxu0
        %v905 = vadd.f32 %v600, %v904
        %v906 = vpop.f32.mrf.mxu0
        %v907 = vpop.f32.mrf.mxu0
        %v908 = vadd.f32 %v603, %v907
        %v909 = vpop.f32.mrf.mxu0
        %910 = vmatprep.mubr.bf16.mxu0 0
        %911 = vmatmul.mubr.bf16.gmra.mxu0 %v707
        %v912 = vpop.f32.mrf.mxu0
        %v913 = vadd.f32 %v608, %v912
        %v914 = vpop.f32.mrf.mxu0
        %v915 = vpop.f32.mrf.mxu0
        %v916 = vadd.f32 %v611, %v915
        %v917 = vpop.f32.mrf.mxu0
        %918 = vmatprep.mubr.bf16.mxu0 0
        %919 = vmatmul.mubr.bf16.gmra.mxu0 %v708
        %v920 = vpop.f32.mrf.mxu0
        %v921 = vadd.f32 %v616, %v920
        %v922 = vpop.f32.mrf.mxu0
        %v923 = vpop.f32.mrf.mxu0
        %v924 = vadd.f32 %v619, %v923
        %v925 = vpop.f32.mrf.mxu0
        %926 = vmatprep.mubr.bf16.mxu0 0
        %927 = vmatmul.mubr.bf16.gmra.mxu0 %v709
        %v928 = vpop.f32.mrf.mxu0
        %v929 = vadd.f32 %v624, %v928
        %v930 = vpop.f32.mrf.mxu0
        %v931 = vpop.f32.mrf.mxu0
        %v932 = vadd.f32 %v627, %v931
        %v933 = vpop.f32.mrf.mxu0
        %934 = vdwg.mxu0
        %s935 = sadd.s32 %s220, 2
        %s936 = smul.u32 %s935, 2
        %s937 = smul.addr %s936, 4
        %s938 = scalar_lea.vmem %s191, %s937 [#allocation2]
        %v939 = vld [vmem:[%s938] sm:$0xf]
        %v940 = vld [vmem:[%s938 + $0x4] sm:$0xf]
        %v941 = vld [vmem:[%s938 + $0x8] sm:$0xf]
        %v942 = vld [vmem:[%s938 + $0xc] sm:$0xf]
        %v943 = vld [vmem:[%s938 + $0x10] sm:$0xf]
        %v944 = vld [vmem:[%s938 + $0x14] sm:$0xf]
        %v945 = vld [vmem:[%s938 + $0x18] sm:$0xf]
        %v946 = vld [vmem:[%s938 + $0x1c] sm:$0xf]
        %v947 = vld [vmem:[%s938 + $0x20] sm:$0xf]
        %v948 = vld [vmem:[%s938 + $0x24] sm:$0xf]
        %v949 = vld [vmem:[%s938 + $0x28] sm:$0xf]
        %v950 = vld [vmem:[%s938 + $0x2c] sm:$0xf]
        %v951 = vld [vmem:[%s938 + $0x30] sm:$0xf]
        %v952 = vld [vmem:[%s938 + $0x34] sm:$0xf]
        %v953 = vld [vmem:[%s938 + $0x38] sm:$0xf]
        %v954 = vld [vmem:[%s938 + $0x3c] sm:$0xf]
        %v955 = vld [vmem:[%s938 + $0x40] sm:$0xf]
        %v956 = vld [vmem:[%s938 + $0x44] sm:$0xf]
        %v957 = vld [vmem:[%s938 + $0x48] sm:$0xf]
        %v958 = vld [vmem:[%s938 + $0x4c] sm:$0xf]
        %v959 = vld [vmem:[%s938 + $0x50] sm:$0xf]
        %v960 = vld [vmem:[%s938 + $0x54] sm:$0xf]
        %v961 = vld [vmem:[%s938 + $0x58] sm:$0xf]
        %v962 = vld [vmem:[%s938 + $0x5c] sm:$0xf]
        %v963 = vld [vmem:[%s938 + $0x60] sm:$0xf]
        %v964 = vld [vmem:[%s938 + $0x64] sm:$0xf]
        %v965 = vld [vmem:[%s938 + $0x68] sm:$0xf]
        %v966 = vld [vmem:[%s938 + $0x6c] sm:$0xf]
        %v967 = vld [vmem:[%s938 + $0x70] sm:$0xf]
        %v968 = vld [vmem:[%s938 + $0x74] sm:$0xf]
        %v969 = vld [vmem:[%s938 + $0x78] sm:$0xf]
        %v970 = vld [vmem:[%s938 + $0x7c] sm:$0xf]
        %s971 = scalar_lea.vmem [#allocation5], 128
        %v972 = vld [vmem:[%s971] sm:$0xf]
        %v973 = vld [vmem:[%s971 + $0x4] sm:$0xf]
        %v974 = vld [vmem:[%s971 + $0x8] sm:$0xf]
        %v975 = vld [vmem:[%s971 + $0xc] sm:$0xf]
        %v976 = vld [vmem:[%s971 + $0x10] sm:$0xf]
        %v977 = vld [vmem:[%s971 + $0x14] sm:$0xf]
        %v978 = vld [vmem:[%s971 + $0x18] sm:$0xf]
        %v979 = vld [vmem:[%s971 + $0x1c] sm:$0xf]
        %v980 = vld [vmem:[%s971 + $0x20] sm:$0xf]
        %v981 = vld [vmem:[%s971 + $0x24] sm:$0xf]
        %v982 = vld [vmem:[%s971 + $0x28] sm:$0xf]
        %v983 = vld [vmem:[%s971 + $0x2c] sm:$0xf]
        %v984 = vld [vmem:[%s971 + $0x30] sm:$0xf]
        %v985 = vld [vmem:[%s971 + $0x34] sm:$0xf]
        %v986 = vld [vmem:[%s971 + $0x38] sm:$0xf]
        %v987 = vld [vmem:[%s971 + $0x3c] sm:$0xf]
        %v1020 = vunpack.c.l.b16 %v939
        %v1021 = vunpack.c.l.b16 %v940
        %v1022 = vunpack.c.l.b16 %v941
        %v1023 = vunpack.c.l.b16 %v942
        %v1024 = vunpack.c.l.b16 %v943
        %v1025 = vunpack.c.l.b16 %v944
        %v1026 = vunpack.c.l.b16 %v945
        %v1027 = vunpack.c.l.b16 %v946
        %v1028 = vunpack.c.l.b16 %v947
        %v1029 = vunpack.c.l.b16 %v948
        %v1030 = vunpack.c.l.b16 %v949
        %v1031 = vunpack.c.l.b16 %v950
        %v1032 = vunpack.c.l.b16 %v951
        %v1033 = vunpack.c.l.b16 %v952
        %v1034 = vunpack.c.l.b16 %v953
        %v1035 = vunpack.c.l.b16 %v954
        %v1036 = vunpack.c.l.b16 %v955
        %v1037 = vunpack.c.l.b16 %v956
        %v1038 = vunpack.c.l.b16 %v957
        %v1039 = vunpack.c.l.b16 %v958
        %v1040 = vunpack.c.l.b16 %v959
        %v1041 = vunpack.c.l.b16 %v960
        %v1042 = vunpack.c.l.b16 %v961
        %v1043 = vunpack.c.l.b16 %v962
        %v1044 = vunpack.c.l.b16 %v963
        %v1045 = vunpack.c.l.b16 %v964
        %v1046 = vunpack.c.l.b16 %v965
        %v1047 = vunpack.c.l.b16 %v966
        %v1048 = vunpack.c.l.b16 %v967
        %v1049 = vunpack.c.l.b16 %v968
        %v1050 = vunpack.c.l.b16 %v969
        %v1051 = vunpack.c.l.b16 %v970
        %v1052 = vpack.c.b16 %v1021, %v1020
        %v1053 = vpack.c.b16 %v1023, %v1022
        %v1054 = vpack.c.b16 %v1025, %v1024
        %v1055 = vpack.c.b16 %v1027, %v1026
        %v1056 = vpack.c.b16 %v1029, %v1028
        %v1057 = vpack.c.b16 %v1031, %v1030
        %v1058 = vpack.c.b16 %v1033, %v1032
        %v1059 = vpack.c.b16 %v1035, %v1034
        %v1060 = vpack.c.b16 %v1037, %v1036
        %v1061 = vpack.c.b16 %v1039, %v1038
        %v1062 = vpack.c.b16 %v1041, %v1040
        %v1063 = vpack.c.b16 %v1043, %v1042
        %v1064 = vpack.c.b16 %v1045, %v1044
        %v1065 = vpack.c.b16 %v1047, %v1046
        %v1066 = vpack.c.b16 %v1049, %v1048
        %v1067 = vpack.c.b16 %v1051, %v1050
        %v1100 = vunpack.c.l.b16 %v972
        %v1101 = vunpack.c.l.b16 %v973
        %v1102 = vunpack.c.l.b16 %v974
        %v1103 = vunpack.c.l.b16 %v975
        %v1104 = vunpack.c.l.b16 %v976
        %v1105 = vunpack.c.l.b16 %v977
        %v1106 = vunpack.c.l.b16 %v978
        %v1107 = vunpack.c.l.b16 %v979
        %v1108 = vunpack.c.l.b16 %v980
        %v1109 = vunpack.c.l.b16 %v981
        %v1110 = vunpack.c.l.b16 %v982
        %v1111 = vunpack.c.l.b16 %v983
        %v1112 = vunpack.c.l.b16 %v984
        %v1113 = vunpack.c.l.b16 %v985
        %v1114 = vunpack.c.l.b16 %v986
        %v1115 = vunpack.c.l.b16 %v987
        %v1116 = vpack.c.b16 %v1101, %v1100
        %v1117 = vpack.c.b16 %v1103, %v1102
        %v1118 = vpack.c.b16 %v1105, %v1104
        %v1119 = vpack.c.b16 %v1107, %v1106
        %v1120 = vpack.c.b16 %v1109, %v1108
        %v1121 = vpack.c.b16 %v1111, %v1110
        %v1122 = vpack.c.b16 %v1113, %v1112
        %v1123 = vpack.c.b16 %v1115, %v1114
        %1132 = vmatprep.subr.bf16.mxu0 0
        %1133 = vmatpush1.bf16.msra.mxu0 %v1123
        %1134 = vmatprep.subr.bf16.mxu0 0
        %1135 = vmatpush1.bf16.msra.mxu0 %v1122
        %1136 = vmatprep.subr.bf16.mxu0 0
        %1137 = vmatpush1.bf16.msra.mxu0 %v1121
        %1138 = vmatprep.subr.bf16.mxu0 0
        %1139 = vmatpush1.bf16.msra.mxu0 %v1120
        %1140 = vmatprep.subr.bf16.mxu0 0
        %1141 = vmatpush1.bf16.msra.mxu0 %v1119
        %1142 = vmatprep.subr.bf16.mxu0 0
        %1143 = vmatpush1.bf16.msra.mxu0 %v1118
        %1144 = vmatprep.subr.bf16.mxu0 0
        %1145 = vmatpush1.bf16.msra.mxu0 %v1117
        %1146 = vmatprep.subr.bf16.mxu0 0
        %1147 = vmatpush1.bf16.msra.mxu0 %v1116
        %1148 = vmatprep.subr.bf16.mxu0 0
        %1149 = vmatpush2.bf16.msra.mxu0 0
        %1150 = vmatprep.subr.bf16.mxu0 0
        %1151 = vmatpush2.bf16.msra.mxu0 0
        %1152 = vmatprep.subr.bf16.mxu0 0
        %1153 = vmatpush2.bf16.msra.mxu0 0
        %1154 = vmatprep.subr.bf16.mxu0 0
        %1155 = vmatpush2.bf16.msra.mxu0 0
        %1156 = vmatprep.subr.bf16.mxu0 0
        %1157 = vmatpush2.bf16.msra.mxu0 0
        %1158 = vmatprep.subr.bf16.mxu0 0
        %1159 = vmatpush2.bf16.msra.mxu0 0
        %1160 = vmatprep.subr.bf16.mxu0 0
        %1161 = vmatpush2.bf16.msra.mxu0 0
        %1162 = vmatprep.subr.bf16.mxu0 0
        %1163 = vmatpush2.bf16.msra.mxu0 0
        %1164 = vmatprep.mubr.bf16.mxu0 0
        %1165 = vmatmul.mubr.bf16.gmra.mxu0 %v1052
        %v1166 = vpop.f32.mrf.mxu0
        %v1167 = vadd.f32 0.0, %v1166
        %v1168 = vpop.f32.mrf.mxu0
        %v1169 = vpop.f32.mrf.mxu0
        %v1170 = vadd.f32 0.0, %v1169
        %v1171 = vpop.f32.mrf.mxu0
        %1172 = vmatprep.mubr.bf16.mxu0 0
        %1173 = vmatmul.mubr.bf16.gmra.mxu0 %v1053
        %v1174 = vpop.f32.mrf.mxu0
        %v1175 = vadd.f32 0.0, %v1174
        %v1176 = vpop.f32.mrf.mxu0
        %v1177 = vpop.f32.mrf.mxu0
        %v1178 = vadd.f32 0.0, %v1177
        %v1179 = vpop.f32.mrf.mxu0
        %1180 = vmatprep.mubr.bf16.mxu0 0
        %1181 = vmatmul.mubr.bf16.gmra.mxu0 %v1054
        %v1182 = vpop.f32.mrf.mxu0
        %v1183 = vadd.f32 0.0, %v1182
        %v1184 = vpop.f32.mrf.mxu0
        %v1185 = vpop.f32.mrf.mxu0
        %v1186 = vadd.f32 0.0, %v1185
        %v1187 = vpop.f32.mrf.mxu0
        %1188 = vmatprep.mubr.bf16.mxu0 0
        %1189 = vmatmul.mubr.bf16.gmra.mxu0 %v1055
        %v1190 = vpop.f32.mrf.mxu0
        %v1191 = vadd.f32 0.0, %v1190
        %v1192 = vpop.f32.mrf.mxu0
        %v1193 = vpop.f32.mrf.mxu0
        %v1194 = vadd.f32 0.0, %v1193
        %v1195 = vpop.f32.mrf.mxu0
        %1196 = vmatprep.mubr.bf16.mxu0 0
        %1197 = vmatmul.mubr.bf16.gmra.mxu0 %v1056
        %v1198 = vpop.f32.mrf.mxu0
        %v1199 = vadd.f32 0.0, %v1198
        %v1200 = vpop.f32.mrf.mxu0
        %v1201 = vpop.f32.mrf.mxu0
        %v1202 = vadd.f32 0.0, %v1201
        %v1203 = vpop.f32.mrf.mxu0
        %1204 = vmatprep.mubr.bf16.mxu0 0
        %1205 = vmatmul.mubr.bf16.gmra.mxu0 %v1057
        %v1206 = vpop.f32.mrf.mxu0
        %v1207 = vadd.f32 0.0, %v1206
        %v1208 = vpop.f32.mrf.mxu0
        %v1209 = vpop.f32.mrf.mxu0
        %v1210 = vadd.f32 0.0, %v1209
        %v1211 = vpop.f32.mrf.mxu0
        %1212 = vmatprep.mubr.bf16.mxu0 0
        %1213 = vmatmul.mubr.bf16.gmra.mxu0 %v1058
        %v1214 = vpop.f32.mrf.mxu0
        %v1215 = vadd.f32 0.0, %v1214
        %v1216 = vpop.f32.mrf.mxu0
        %v1217 = vpop.f32.mrf.mxu0
        %v1218 = vadd.f32 0.0, %v1217
        %v1219 = vpop.f32.mrf.mxu0
        %1220 = vmatprep.mubr.bf16.mxu0 0
        %1221 = vmatmul.mubr.bf16.gmra.mxu0 %v1059
        %v1222 = vpop.f32.mrf.mxu0
        %v1223 = vadd.f32 0.0, %v1222
        %v1224 = vpop.f32.mrf.mxu0
        %v1225 = vpop.f32.mrf.mxu0
        %v1226 = vadd.f32 0.0, %v1225
        %v1227 = vpop.f32.mrf.mxu0
        %1228 = vmatprep.mubr.bf16.mxu0 0
        %1229 = vmatmul.mubr.bf16.gmra.mxu0 %v1060
        %v1230 = vpop.f32.mrf.mxu0
        %v1231 = vadd.f32 0.0, %v1230
        %v1232 = vpop.f32.mrf.mxu0
        %v1233 = vpop.f32.mrf.mxu0
        %v1234 = vadd.f32 0.0, %v1233
        %v1235 = vpop.f32.mrf.mxu0
        %1236 = vmatprep.mubr.bf16.mxu0 0
        %1237 = vmatmul.mubr.bf16.gmra.mxu0 %v1061
        %v1238 = vpop.f32.mrf.mxu0
        %v1239 = vadd.f32 0.0, %v1238
        %v1240 = vpop.f32.mrf.mxu0
        %v1241 = vpop.f32.mrf.mxu0
        %v1242 = vadd.f32 0.0, %v1241
        %v1243 = vpop.f32.mrf.mxu0
        %1244 = vmatprep.mubr.bf16.mxu0 0
        %1245 = vmatmul.mubr.bf16.gmra.mxu0 %v1062
        %v1246 = vpop.f32.mrf.mxu0
        %v1247 = vadd.f32 0.0, %v1246
        %v1248 = vpop.f32.mrf.mxu0
        %v1249 = vpop.f32.mrf.mxu0
        %v1250 = vadd.f32 0.0, %v1249
        %v1251 = vpop.f32.mrf.mxu0
        %1252 = vmatprep.mubr.bf16.mxu0 0
        %1253 = vmatmul.mubr.bf16.gmra.mxu0 %v1063
        %v1254 = vpop.f32.mrf.mxu0
        %v1255 = vadd.f32 0.0, %v1254
        %v1256 = vpop.f32.mrf.mxu0
        %v1257 = vpop.f32.mrf.mxu0
        %v1258 = vadd.f32 0.0, %v1257
        %v1259 = vpop.f32.mrf.mxu0
        %1260 = vmatprep.mubr.bf16.mxu0 0
        %1261 = vmatmul.mubr.bf16.gmra.mxu0 %v1064
        %v1262 = vpop.f32.mrf.mxu0
        %v1263 = vadd.f32 0.0, %v1262
        %v1264 = vpop.f32.mrf.mxu0
        %v1265 = vpop.f32.mrf.mxu0
        %v1266 = vadd.f32 0.0, %v1265
        %v1267 = vpop.f32.mrf.mxu0
        %1268 = vmatprep.mubr.bf16.mxu0 0
        %1269 = vmatmul.mubr.bf16.gmra.mxu0 %v1065
        %v1270 = vpop.f32.mrf.mxu0
        %v1271 = vadd.f32 0.0, %v1270
        %v1272 = vpop.f32.mrf.mxu0
        %v1273 = vpop.f32.mrf.mxu0
        %v1274 = vadd.f32 0.0, %v1273
        %v1275 = vpop.f32.mrf.mxu0
        %1276 = vmatprep.mubr.bf16.mxu0 0
        %1277 = vmatmul.mubr.bf16.gmra.mxu0 %v1066
        %v1278 = vpop.f32.mrf.mxu0
        %v1279 = vadd.f32 0.0, %v1278
        %v1280 = vpop.f32.mrf.mxu0
        %v1281 = vpop.f32.mrf.mxu0
        %v1282 = vadd.f32 0.0, %v1281
        %v1283 = vpop.f32.mrf.mxu0
        %1284 = vmatprep.mubr.bf16.mxu0 0
        %1285 = vmatmul.mubr.bf16.gmra.mxu0 %v1067
        %v1286 = vpop.f32.mrf.mxu0
        %v1287 = vadd.f32 0.0, %v1286
        %v1288 = vpop.f32.mrf.mxu0
        %v1289 = vpop.f32.mrf.mxu0
        %v1290 = vadd.f32 0.0, %v1289
        %v1291 = vpop.f32.mrf.mxu0
        %1292 = vdwg.mxu0
        %v1293 = vadd.f32 %v809, %v1167
        %v1294 = vadd.f32 %v812, %v1170
        %v1295 = vadd.f32 %v817, %v1175
        %v1296 = vadd.f32 %v820, %v1178
        %v1297 = vadd.f32 %v825, %v1183
        %v1298 = vadd.f32 %v828, %v1186
        %v1299 = vadd.f32 %v833, %v1191
        %v1300 = vadd.f32 %v836, %v1194
        %v1301 = vadd.f32 %v841, %v1199
        %v1302 = vadd.f32 %v844, %v1202
        %v1303 = vadd.f32 %v849, %v1207
        %v1304 = vadd.f32 %v852, %v1210
        %v1305 = vadd.f32 %v857, %v1215
        %v1306 = vadd.f32 %v860, %v1218
        %v1307 = vadd.f32 %v865, %v1223
        %v1308 = vadd.f32 %v868, %v1226
        %v1309 = vadd.f32 %v873, %v1231
        %v1310 = vadd.f32 %v876, %v1234
        %v1311 = vadd.f32 %v881, %v1239
        %v1312 = vadd.f32 %v884, %v1242
        %v1313 = vadd.f32 %v889, %v1247
        %v1314 = vadd.f32 %v892, %v1250
        %v1315 = vadd.f32 %v897, %v1255
        %v1316 = vadd.f32 %v900, %v1258
        %v1317 = vadd.f32 %v905, %v1263
        %v1318 = vadd.f32 %v908, %v1266
        %v1319 = vadd.f32 %v913, %v1271
        %v1320 = vadd.f32 %v916, %v1274
        %v1321 = vadd.f32 %v921, %v1279
        %v1322 = vadd.f32 %v924, %v1282
        %v1323 = vadd.f32 %v929, %v1287
        %v1324 = vadd.f32 %v932, %v1290
        %v1325 = vld [vmem:[%s2] sm:$0x1]
        %v1327 = vlaneseq
        %v1328 = vshrl.u32 %v1327, 7
        %v1329 = vsub.s32 0, %v1328
        %v1330 = vrot.slane %v1325, %v1329
        %v1332 = vadd.f32 %v1293, %v1330
        %v1333 = vadd.f32 %v1294, %v1330
        %v1334 = vadd.f32 %v1295, %v1330
        %v1335 = vadd.f32 %v1296, %v1330
        %v1336 = vadd.f32 %v1297, %v1330
        %v1337 = vadd.f32 %v1298, %v1330
        %v1338 = vadd.f32 %v1299, %v1330
        %v1339 = vadd.f32 %v1300, %v1330
        %v1340 = vadd.f32 %v1301, %v1330
        %v1341 = vadd.f32 %v1302, %v1330
        %v1342 = vadd.f32 %v1303, %v1330
        %v1343 = vadd.f32 %v1304, %v1330
        %v1344 = vadd.f32 %v1305, %v1330
        %v1345 = vadd.f32 %v1306, %v1330
        %v1346 = vadd.f32 %v1307, %v1330
        %v1347 = vadd.f32 %v1308, %v1330
        %v1348 = vadd.f32 %v1309, %v1330
        %v1349 = vadd.f32 %v1310, %v1330
        %v1350 = vadd.f32 %v1311, %v1330
        %v1351 = vadd.f32 %v1312, %v1330
        %v1352 = vadd.f32 %v1313, %v1330
        %v1353 = vadd.f32 %v1314, %v1330
        %v1354 = vadd.f32 %v1315, %v1330
        %v1355 = vadd.f32 %v1316, %v1330
        %v1356 = vadd.f32 %v1317, %v1330
        %v1357 = vadd.f32 %v1318, %v1330
        %v1358 = vadd.f32 %v1319, %v1330
        %v1359 = vadd.f32 %v1320, %v1330
        %v1360 = vadd.f32 %v1321, %v1330
        %v1361 = vadd.f32 %v1322, %v1330
        %v1362 = vadd.f32 %v1323, %v1330
        %v1363 = vadd.f32 %v1324, %v1330
        %v1364 = vmax.f32 %v1332, 0.0
        %v1365 = vmax.f32 %v1333, 0.0
        %v1366 = vmax.f32 %v1334, 0.0
        %v1367 = vmax.f32 %v1335, 0.0
        %v1368 = vmax.f32 %v1336, 0.0
        %v1369 = vmax.f32 %v1337, 0.0
        %v1370 = vmax.f32 %v1338, 0.0
        %v1371 = vmax.f32 %v1339, 0.0
        %v1372 = vmax.f32 %v1340, 0.0
        %v1373 = vmax.f32 %v1341, 0.0
        %v1374 = vmax.f32 %v1342, 0.0
        %v1375 = vmax.f32 %v1343, 0.0
        %v1376 = vmax.f32 %v1344, 0.0
        %v1377 = vmax.f32 %v1345, 0.0
        %v1378 = vmax.f32 %v1346, 0.0
        %v1379 = vmax.f32 %v1347, 0.0
        %v1380 = vmax.f32 %v1348, 0.0
        %v1381 = vmax.f32 %v1349, 0.0
        %v1382 = vmax.f32 %v1350, 0.0
        %v1383 = vmax.f32 %v1351, 0.0
        %v1384 = vmax.f32 %v1352, 0.0
        %v1385 = vmax.f32 %v1353, 0.0
        %v1386 = vmax.f32 %v1354, 0.0
        %v1387 = vmax.f32 %v1355, 0.0
        %v1388 = vmax.f32 %v1356, 0.0
        %v1389 = vmax.f32 %v1357, 0.0
        %v1390 = vmax.f32 %v1358, 0.0
        %v1391 = vmax.f32 %v1359, 0.0
        %v1392 = vmax.f32 %v1360, 0.0
        %v1393 = vmax.f32 %v1361, 0.0
        %v1394 = vmax.f32 %v1362, 0.0
        %v1395 = vmax.f32 %v1363, 0.0
        %v1396 = vpack.c.bf16 %v1365, %v1364
        %v1397 = vpack.c.bf16 %v1367, %v1366
        %v1398 = vpack.c.bf16 %v1369, %v1368
        %v1399 = vpack.c.bf16 %v1371, %v1370
        %v1400 = vpack.c.bf16 %v1373, %v1372
        %v1401 = vpack.c.bf16 %v1375, %v1374
        %v1402 = vpack.c.bf16 %v1377, %v1376
        %v1403 = vpack.c.bf16 %v1379, %v1378
        %v1404 = vpack.c.bf16 %v1381, %v1380
        %v1405 = vpack.c.bf16 %v1383, %v1382
        %v1406 = vpack.c.bf16 %v1385, %v1384
        %v1407 = vpack.c.bf16 %v1387, %v1386
        %v1408 = vpack.c.bf16 %v1389, %v1388
        %v1409 = vpack.c.bf16 %v1391, %v1390
        %v1410 = vpack.c.bf16 %v1393, %v1392
        %v1411 = vpack.c.bf16 %v1395, %v1394
        %v1428 = vunpack.c.l.b16 %v1396
        %v1429 = vunpack.c.h.b16 %v1396
        %v1430 = vunpack.c.l.b16 %v1397
        %v1431 = vunpack.c.h.b16 %v1397
        %v1432 = vunpack.c.l.b16 %v1398
        %v1433 = vunpack.c.h.b16 %v1398
        %v1434 = vunpack.c.l.b16 %v1399
        %v1435 = vunpack.c.h.b16 %v1399
        %v1436 = vunpack.c.l.b16 %v1400
        %v1437 = vunpack.c.h.b16 %v1400
        %v1438 = vunpack.c.l.b16 %v1401
        %v1439 = vunpack.c.h.b16 %v1401
        %v1440 = vunpack.c.l.b16 %v1402
        %v1441 = vunpack.c.h.b16 %v1402
        %v1442 = vunpack.c.l.b16 %v1403
        %v1443 = vunpack.c.h.b16 %v1403
        %v1444 = vunpack.c.l.b16 %v1404
        %v1445 = vunpack.c.h.b16 %v1404
        %v1446 = vunpack.c.l.b16 %v1405
        %v1447 = vunpack.c.h.b16 %v1405
        %v1448 = vunpack.c.l.b16 %v1406
        %v1449 = vunpack.c.h.b16 %v1406
        %v1450 = vunpack.c.l.b16 %v1407
        %v1451 = vunpack.c.h.b16 %v1407
        %v1452 = vunpack.c.l.b16 %v1408
        %v1453 = vunpack.c.h.b16 %v1408
        %v1454 = vunpack.c.l.b16 %v1409
        %v1455 = vunpack.c.h.b16 %v1409
        %v1456 = vunpack.c.l.b16 %v1410
        %v1457 = vunpack.c.h.b16 %v1410
        %v1458 = vunpack.c.l.b16 %v1411
        %v1459 = vunpack.c.h.b16 %v1411
        %v1460 = vpack.c.b16 %v1428, %v1428
        %v1461 = vpack.c.b16 %v1429, %v1429
        %v1462 = vpack.c.b16 %v1430, %v1430
        %v1463 = vpack.c.b16 %v1431, %v1431
        %v1464 = vpack.c.b16 %v1432, %v1432
        %v1465 = vpack.c.b16 %v1433, %v1433
        %v1466 = vpack.c.b16 %v1434, %v1434
        %v1467 = vpack.c.b16 %v1435, %v1435
        %v1468 = vpack.c.b16 %v1436, %v1436
        %v1469 = vpack.c.b16 %v1437, %v1437
        %v1470 = vpack.c.b16 %v1438, %v1438
        %v1471 = vpack.c.b16 %v1439, %v1439
        %v1472 = vpack.c.b16 %v1440, %v1440
        %v1473 = vpack.c.b16 %v1441, %v1441
        %v1474 = vpack.c.b16 %v1442, %v1442
        %v1475 = vpack.c.b16 %v1443, %v1443
        %v1476 = vpack.c.b16 %v1444, %v1444
        %v1477 = vpack.c.b16 %v1445, %v1445
        %v1478 = vpack.c.b16 %v1446, %v1446
        %v1479 = vpack.c.b16 %v1447, %v1447
        %v1480 = vpack.c.b16 %v1448, %v1448
        %v1481 = vpack.c.b16 %v1449, %v1449
        %v1482 = vpack.c.b16 %v1450, %v1450
        %v1483 = vpack.c.b16 %v1451, %v1451
        %v1484 = vpack.c.b16 %v1452, %v1452
        %v1485 = vpack.c.b16 %v1453, %v1453
        %v1486 = vpack.c.b16 %v1454, %v1454
        %v1487 = vpack.c.b16 %v1455, %v1455
        %v1488 = vpack.c.b16 %v1456, %v1456
        %v1489 = vpack.c.b16 %v1457, %v1457
        %v1490 = vpack.c.b16 %v1458, %v1458
        %v1491 = vpack.c.b16 %v1459, %v1459
        %1524 = vst [vmem:[%s217] sm:$0xf] %v1460
        %1525 = vst [vmem:[%s217 + $0x4] sm:$0xf] %v1461
        %1526 = vst [vmem:[%s217 + $0x8] sm:$0xf] %v1462
        %1527 = vst [vmem:[%s217 + $0xc] sm:$0xf] %v1463
        %1528 = vst [vmem:[%s217 + $0x10] sm:$0xf] %v1464
        %1529 = vst [vmem:[%s217 + $0x14] sm:$0xf] %v1465
        %1530 = vst [vmem:[%s217 + $0x18] sm:$0xf] %v1466
        %1531 = vst [vmem:[%s217 + $0x1c] sm:$0xf] %v1467
        %1532 = vst [vmem:[%s217 + $0x20] sm:$0xf] %v1468
        %1533 = vst [vmem:[%s217 + $0x24] sm:$0xf] %v1469
        %1534 = vst [vmem:[%s217 + $0x28] sm:$0xf] %v1470
        %1535 = vst [vmem:[%s217 + $0x2c] sm:$0xf] %v1471
        %1536 = vst [vmem:[%s217 + $0x30] sm:$0xf] %v1472
        %1537 = vst [vmem:[%s217 + $0x34] sm:$0xf] %v1473
        %1538 = vst [vmem:[%s217 + $0x38] sm:$0xf] %v1474
        %1539 = vst [vmem:[%s217 + $0x3c] sm:$0xf] %v1475
        %1540 = vst [vmem:[%s217 + $0x40] sm:$0xf] %v1476
        %1541 = vst [vmem:[%s217 + $0x44] sm:$0xf] %v1477
        %1542 = vst [vmem:[%s217 + $0x48] sm:$0xf] %v1478
        %1543 = vst [vmem:[%s217 + $0x4c] sm:$0xf] %v1479
        %1544 = vst [vmem:[%s217 + $0x50] sm:$0xf] %v1480
        %1545 = vst [vmem:[%s217 + $0x54] sm:$0xf] %v1481
        %1546 = vst [vmem:[%s217 + $0x58] sm:$0xf] %v1482
        %1547 = vst [vmem:[%s217 + $0x5c] sm:$0xf] %v1483
        %1548 = vst [vmem:[%s217 + $0x60] sm:$0xf] %v1484
        %1549 = vst [vmem:[%s217 + $0x64] sm:$0xf] %v1485
        %1550 = vst [vmem:[%s217 + $0x68] sm:$0xf] %v1486
        %1551 = vst [vmem:[%s217 + $0x6c] sm:$0xf] %v1487
        %1552 = vst [vmem:[%s217 + $0x70] sm:$0xf] %v1488
        %1553 = vst [vmem:[%s217 + $0x74] sm:$0xf] %v1489
        %1554 = vst [vmem:[%s217 + $0x78] sm:$0xf] %v1490
        %1555 = vst [vmem:[%s217 + $0x7c] sm:$0xf] %v1491
        %s1556 = sand.u32 %s111, 1
        %s1557 = scalar_lea.sflag [#allocation4], %s1556
        %s1558 = sand.u32 %s111, 1
        %s1559 = smul.addr %s1558, 128
        %s1560 = scalar_lea.vmem [#allocation7], %s1559
        // Predicated region
        $region41: #{tpu_custom_call.1} parent=31 // pred_check
          %p1561 = pneg %p121
        $region42: #{tpu_custom_call.1} parent=31 // pred_check_branch
          %1563 = sbr.rel (%p1561) target = $region44
        $region43: #{tpu_custom_call.1} parent=31 // pred_region
          %s1564 = smul.u32 32, %s26
          %s1566 = ssub.s32 2048, 2048
          %1567 = vsyncadd %s1557, %s1566
          %s1568 = smul.addr %s25, 32
          %s1569 = sadd.s32 %s1564, %s1568
          %s1570 = smul.addr %s1569, 64
          %s1571 = scalar_lea.hbm %s3, %s1570
          %s1572 = sshll.u32 %s1560, 4
          %s1573 = int_to_ptr.vmem [resolvable:$true] %s1572
          %1578 = dma.vmem_to_hbm [thread:$0]  %s1573, 2048, %s1571, %s1557, 64, 64, 4
        $region44: #{tpu_custom_call.1} parent=31 // pred_fallthru
          _
      $region32: #{tpu_custom_call.1} parent=5 // pred_fallthru
        _
      %p1579 = scmp.le.s32.totalorder 2, %s16
      // Predicated region
      $region45: #{tpu_custom_call.1} parent=5 // pred_check
        %p1580 = pneg %p1579
      $region46: #{tpu_custom_call.1} parent=5 // pred_check_branch
        %1582 = sbr.rel (%p1580) target = $region48
      $region47: #{tpu_custom_call.1} parent=5 // pred_region
        %s1583 = ssub.s32 %s16, 2
        // Predicated region
        $region49: #{tpu_custom_call.1} parent=47 // pred_check
          %p1584 = pneg %p127
        $region50: #{tpu_custom_call.1} parent=47 // pred_check_branch
          %1586 = sbr.rel (%p1584) target = $region52
        $region51: #{tpu_custom_call.1} parent=47 // pred_region
          %s1587 = sand.u32 %s112, 1
          %s1588 = scalar_lea.sflag [#allocation4], %s1587
          %s1589 = sand.u32 %s112, 1
          %s1590 = smul.addr %s1589, 128
          %s1591 = scalar_lea.vmem [#allocation7], %s1590
          %1592 = dma.done %s1588, 2048
        $region52: #{tpu_custom_call.1} parent=47 // pred_fallthru
          _
      $region48: #{tpu_custom_call.1} parent=5 // pred_fallthru
        _
    $region6: #{tpu_custom_call.1} parent=1 // loop_footer
      %s20 = sadd.s32 1, %s16
    $region7: #{tpu_custom_call.1} parent=1 // loop_footer_branch
      %15 = sbr.rel target = $region3
    $region8: #{tpu_custom_call.1} parent=1 // loop_exit
      _
    %1593 = vsyncpa [#allocation3], 1
    %s1594 = scalar_lea.sflag [#allocation3], 1
    %1595 = vsyncpa %s1594, 1
    %1596 = vsyncpa [#allocation6], 1
    %1597 = vsyncpa [#allocation4], 1
    %s1598 = scalar_lea.sflag [#allocation4], 1
    %1599 = vsyncpa %s1598, 1

</llo_original>
